<compile_context>
chip_gen: v7x
topology: tpu7x:2x2x1
jax: 0.10.0
libtpu: 0.0.40
codegen_flags: <defaults>
</compile_context>

<pallas_src>
import functools

import jax
import jax.numpy as jnp
from jax.experimental import pallas as pl
from jax.experimental.pallas import tpu as pltpu

LANES = 128       # lane-dense channel padding (input_dim=3 / hidden=33 -> 128)
IMP_COL = 126     # impedance folded into a spare lane of X
ONES_COL = 127    # all-ones lane -> incoming degree from the same A@X matmul
NUM_LAYERS = 3


def _round_up(a, m):
    return (a + m - 1) // m * m


def _vmem_budget_bytes():
    """~80% of physical VMEM, capped at 110 MiB: ~51 MiB on v7x (64 MiB VMEM),
    ~102 MiB on v5e/v6e (128 MiB VMEM)."""
    cap = 64 * 1024 * 1024
    try:
        cap = int(pltpu.get_tpu_info().vmem_capacity_bytes)
    except Exception:
        pass  # conservative fallback
    return min(int(cap * 0.8), 110 * 1024 * 1024)


# --------------------------------------------------------------------------
# Fused path: all 3 conv layers + fc in one kernel, A resident in VMEM.
# --------------------------------------------------------------------------
def _fused_gcn_kernel(beta, a_ref, x0_ref, w_ref, b_ref, wi_ref,
                      wfc_ref, bfc_ref, o_ref, h_ref):
    """grid=(NUM_LAYERS,) sequential.  A (int8) and X stay resident; the
    per-layer activations live in the f32 VMEM scratch h_ref."""
    layer = pl.program_id(0)
    last = pl.num_programs(0) - 1

    @pl.when(layer == 0)
    def _():
        h_ref[...] = x0_ref[...].astype(h_ref.dtype)

    x = h_ref[...]                                   # [Np, 128] f32
    x_bf = x.astype(jnp.bfloat16)
    a_bf = a_ref[...].astype(jnp.bfloat16)           # int8 -> bf16 on the VPU

    # Single MXU pass: aggregated source features + incoming degree (ones lane)
    # + aggregated source impedance (imp lane).  Uses A @ (X W) == (A X) W.
    agg = jnp.dot(a_bf, x_bf, preferred_element_type=jnp.float32)
    deg = agg[:, ONES_COL:ONES_COL + 1]
    deg_imp = agg[:, IMP_COL:IMP_COL + 1]

    h = jnp.dot(agg.astype(jnp.bfloat16), w_ref[...],
                preferred_element_type=jnp.float32) + deg * b_ref[...]
    h = h + deg_imp * jnp.dot(x_bf, wi_ref[...],
                              preferred_element_type=jnp.float32)

    # LeakyReLU on all but the last conv layer (f32 VPU epilogue).
    h = jnp.where((h < 0) & (layer < last), beta * h, h)

    # Carry the impedance / ones auxiliary lanes through for the next layer.
    col = jax.lax.broadcasted_iota(jnp.int32, h.shape, dimension=1)
    is_aux = (col == IMP_COL) | (col == ONES_COL)
    h_ref[...] = jnp.where(is_aux, x, h)

    @pl.when(layer == last)
    def _():
        out = jnp.dot(h.astype(jnp.bfloat16), wfc_ref[...],
                      preferred_element_type=jnp.float32) + bfc_ref[...]
        o_ref[...] = out.astype(o_ref.dtype)


def _run_fused(adj, x_aug, w_stack, b_stack, wi_stack, wfc, bfc, *, beta,
               vmem_budget):
    n_pad = adj.shape[0]
    est = (2 * n_pad * n_pad                 # A int8 (double-buffered)
           + 2 * n_pad * LANES * 2           # X0 bf16 (double-buffered)
           + n_pad * LANES * 4               # H scratch f32
           + 2 * n_pad * LANES * 4           # output f32 (double-buffered)
           + 8 * LANES * LANES * 2           # weights
           + 6 * n_pad * LANES * 4)          # matmul intermediates headroom
    vmem_limit = int(min(max(2 * est, 32 * 1024 * 1024), vmem_budget))

    kernel = functools.partial(_fused_gcn_kernel, beta)
    return pl.pallas_call(
        kernel,
        out_shape=jax.ShapeDtypeStruct((n_pad, LANES), jnp.float32),
        grid_spec=pltpu.PrefetchScalarGridSpec(
            num_scalar_prefetch=0,
            grid=(NUM_LAYERS,),
            in_specs=[
                pl.BlockSpec((n_pad, n_pad), lambda l: (0, 0)),           # A
                pl.BlockSpec((n_pad, LANES), lambda l: (0, 0)),           # X0
                pl.BlockSpec((None, LANES, LANES), lambda l: (l, 0, 0)),  # W[l]
                pl.BlockSpec((None, 1, LANES), lambda l: (l, 0, 0)),      # b[l]
                pl.BlockSpec((None, LANES, LANES), lambda l: (l, 0, 0)),  # Wi[l]
                pl.BlockSpec((LANES, LANES), lambda l: (0, 0)),           # W_fc
                pl.BlockSpec((1, LANES), lambda l: (0, 0)),               # b_fc
            ],
            out_specs=pl.BlockSpec((n_pad, LANES), lambda l: (0, 0)),
            scratch_shapes=[pltpu.VMEM((n_pad, LANES), jnp.float32)]),
        compiler_params=pltpu.CompilerParams(
            dimension_semantics=("arbitrary",),
            vmem_limit_bytes=vmem_limit),
    )(adj, x_aug, w_stack, b_stack, wi_stack, wfc, bfc)


# --------------------------------------------------------------------------
# Tiled streaming path: per-layer kernel, int8 A streamed as (tile_n, tile_k).
# --------------------------------------------------------------------------
def _conv_tiled_kernel(beta, apply_leaky, apply_fc,
                       a_ref, xk_ref, xr_ref, w_ref, b_ref, wi_ref, *rest):
    """One conv layer for a (target-row tile, source chunk) grid point.

    a_ref  : [T, Kc]   int8  adjacency tile, A[t, s] = #edges s->t
    xk_ref : [Kc, 128] bf16  source-node features (+ imp / ones aux lanes)
    xr_ref : [T, 128]  bf16  this tile's target-node features
    """
    if apply_fc:
        wfc_ref, bfc_ref, o_ref, acc_ref = rest
    else:
        o_ref, acc_ref = rest

    k = pl.program_id(1)

    @pl.when(k == 0)
    def _():
        acc_ref[...] = jnp.zeros_like(acc_ref)

    a_bf = a_ref[...].astype(jnp.bfloat16)           # int8 -> bf16 (hidden by DMA)
    acc_ref[...] += jnp.dot(a_bf, xk_ref[...], preferred_element_type=jnp.float32)

    @pl.when(k == pl.num_programs(1) - 1)
    def _():
        agg = acc_ref[...]                            # [T, 128] f32
        deg = agg[:, ONES_COL:ONES_COL + 1]           # incoming degree
        deg_imp = agg[:, IMP_COL:IMP_COL + 1]         # aggregated impedance
        h = jnp.dot(agg.astype(jnp.bfloat16), w_ref[...],
                    preferred_element_type=jnp.float32) + deg * b_ref[...]
        h = h + deg_imp * jnp.dot(xr_ref[...], wi_ref[...],
                                  preferred_element_type=jnp.float32)
        if apply_leaky:
            h = jnp.where(h >= 0, h, beta * h)
        if apply_fc:
            out = jnp.dot(h.astype(jnp.bfloat16), wfc_ref[...],
                          preferred_element_type=jnp.float32) + bfc_ref[...]
            o_ref[...] = out.astype(o_ref.dtype)
        else:
            # Carry the imp / ones auxiliary lanes through to the next layer.
            col = jax.lax.broadcasted_iota(jnp.int32, h.shape, dimension=1)
            is_aux = (col == IMP_COL) | (col == ONES_COL)
            o_ref[...] = jnp.where(is_aux, xr_ref[...].astype(jnp.float32),
                                   h).astype(o_ref.dtype)


def _run_conv_tiled(adj, x_src, x_tgt, w, b, wi, *, beta, apply_leaky, tile_n,
                    tile_k, out_dtype, vmem_budget, wfc=None, bfc=None):
    nr, nc = adj.shape
    grid = (nr // tile_n, nc // tile_k)

    in_specs = [
        pl.BlockSpec((tile_n, tile_k), lambda i, k: (i, k)),   # A (int8)
        pl.BlockSpec((tile_k, LANES), lambda i, k: (k, 0)),    # X source chunk
        pl.BlockSpec((tile_n, LANES), lambda i, k: (i, 0)),    # X target rows
        pl.BlockSpec((LANES, LANES), lambda i, k: (0, 0)),     # W
        pl.BlockSpec((1, LANES), lambda i, k: (0, 0)),         # b
        pl.BlockSpec((LANES, LANES), lambda i, k: (0, 0)),     # W_imp
    ]
    args = [adj, x_src, x_tgt, w, b, wi]
    if wfc is not None:
        in_specs += [pl.BlockSpec((LANES, LANES), lambda i, k: (0, 0)),
                     pl.BlockSpec((1, LANES), lambda i, k: (0, 0))]
        args += [wfc, bfc]

    est = (2 * tile_n * tile_k             # A tiles (int8, double-buffered)
           + 2 * tile_k * LANES * 2        # X source chunks (bf16, db)
           + 2 * tile_n * LANES * 2        # X target rows (bf16, db)
           + 8 * LANES * LANES * 2         # weights
           + tile_n * LANES * 4            # f32 accumulator scratch
           + 2 * tile_n * LANES * 4        # output tiles (f32 worst case, db)
           + 4 * tile_n * LANES * 4)       # epilogue intermediates headroom
    vmem_limit = int(min(max(3 * est, 32 * 1024 * 1024), vmem_budget))

    kernel = functools.partial(_conv_tiled_kernel, beta, apply_leaky,
                               wfc is not None)
    return pl.pallas_call(
        kernel,
        out_shape=jax.ShapeDtypeStruct((nr, LANES), out_dtype),
        grid_spec=pltpu.PrefetchScalarGridSpec(
            num_scalar_prefetch=0,
            grid=grid,
            in_specs=in_specs,
            out_specs=pl.BlockSpec((tile_n, LANES), lambda i, k: (i, 0)),
            scratch_shapes=[pltpu.VMEM((tile_n, LANES), jnp.float32)]),
        compiler_params=pltpu.CompilerParams(
            dimension_semantics=("parallel", "arbitrary"),
            vmem_limit_bytes=vmem_limit),
    )(*args)


# --------------------------------------------------------------------------
# Host-side wrapper.
# --------------------------------------------------------------------------
def _pad_weight(w):
    wp = jnp.zeros((LANES, LANES), jnp.float32)
    return wp.at[:w.shape[0], :w.shape[1]].set(w).astype(jnp.bfloat16)


def _pad_bias(b):
    bp = jnp.zeros((1, LANES), jnp.float32)
    return bp.at[:, :b.shape[1]].set(b)


def _build_x_aug(x, impedance, n_rows):
    n, in_dim = x.shape
    xa = jnp.zeros((n_rows, LANES), jnp.float32)
    xa = xa.at[:n, :in_dim].set(x.astype(jnp.float32))
    xa = xa.at[:n, IMP_COL].set(impedance[:, 0].astype(jnp.float32))
    xa = xa.at[:n, ONES_COL].set(1.0)
    return xa.astype(jnp.bfloat16)


def _build_adj_int8(edge_index, n_rows, n_cols):
    # Edge multiplicities built directly in int8 (no f32 transient); exact as
    # long as no (src, tgt) pair repeats >= 128 times.
    src, tgt = edge_index[0], edge_index[1]
    return jnp.zeros((n_rows, n_cols), jnp.int8).at[tgt, src].add(jnp.int8(1))


def _fit_rows(h, rows):
    if h.shape[0] == rows:
        return h
    if h.shape[0] > rows:
        return h[:rows]
    return jnp.pad(h, ((0, rows - h.shape[0]), (0, 0)))


def impedance_aware_gcn(x, edge_index, impedance, params, beta, *,
                        force_tiled=False, tile_n=None, tile_k=None):
    """Forward: conv1 -> LeakyReLU -> conv2 -> LeakyReLU -> conv3 -> fc."""
    n, in_dim = x.shape
    hidden1 = params["w1"].shape[1]
    hidden2 = params["w2"].shape[1]
    out_dim = params["w3"].shape[1]
    assert max(in_dim, hidden1, hidden2, out_dim) <= IMP_COL

    vmem_budget = _vmem_budget_bytes()

    w1, w2, w3 = (_pad_weight(params[k]) for k in ("w1", "w2", "w3"))
    wi1, wi2, wi3 = (_pad_weight(params[k]) for k in ("wi1", "wi2", "wi3"))
    b1, b2, b3 = (_pad_bias(params[k]) for k in ("b1", "b2", "b3"))
    wfc = _pad_weight(params["wfc"])
    bfc = _pad_bias(params["bfc"])

    # ---- fused single-kernel path (A resident in VMEM, read once) --------
    np_fused = _round_up(max(n, 8), LANES)
    fused_bytes = (2 * np_fused * np_fused + 2 * np_fused * LANES * 2
                   + 9 * np_fused * LANES * 4 + 8 * LANES * LANES * 2)
    if not force_tiled and fused_bytes <= (vmem_budget * 3) // 5:
        adj = _build_adj_int8(edge_index, np_fused, np_fused)
        x_aug = _build_x_aug(x, impedance, np_fused)
        out = _run_fused(adj, x_aug,
                         jnp.stack([w1, w2, w3]), jnp.stack([b1, b2, b3]),
                         jnp.stack([wi1, wi2, wi3]), wfc, bfc,
                         beta=beta, vmem_budget=vmem_budget)
        return out[:n, :1]

    # ---- tiled streaming path (per-layer kernels, int8 A in HBM) ---------
    if tile_k is None:
        tile_k = min(2048, _round_up(n, LANES))            # K chunk (columns)
    if tile_n is None:
        # Large streamed row tiles, but keep >= 2 row steps when possible so
        # the parallel row axis can shard across v7x's two TensorCores.
        tile_n = max(LANES, min(512, _round_up(pl.cdiv(n, 2), LANES)))
    nr = _round_up(n, tile_n)       # target-row padding
    nc = _round_up(n, tile_k)       # source-column padding (decoupled from nr)

    adj = _build_adj_int8(edge_index, nr, nc)
    x_aug = _build_x_aug(x, impedance, max(nr, nc))
    x_src, x_tgt = x_aug[:nc], x_aug[:nr]

    h = _run_conv_tiled(adj, x_src, x_tgt, w1, b1, wi1, beta=beta,
                        apply_leaky=True, tile_n=tile_n, tile_k=tile_k,
                        out_dtype=jnp.bfloat16, vmem_budget=vmem_budget)
    h = _run_conv_tiled(adj, _fit_rows(h, nc), h, w2, b2, wi2, beta=beta,
                        apply_leaky=True, tile_n=tile_n, tile_k=tile_k,
                        out_dtype=jnp.bfloat16, vmem_budget=vmem_budget)
    out = _run_conv_tiled(adj, _fit_rows(h, nc), h, w3, b3, wi3, beta=beta,
                          apply_leaky=False, tile_n=tile_n, tile_k=tile_k,
                          out_dtype=jnp.float32, vmem_budget=vmem_budget,
                          wfc=wfc, bfc=bfc)
    return out[:n, :1]


# --------------------------------------------------------------------------
# Pure-JAX reference + synthetic parameters + test.
# --------------------------------------------------------------------------
def _reference_forward(x, adj, impedance, params, beta):
    deg_imp = adj @ impedance

    def conv(h, w, b, wi):
        h_lin = h @ w + b
        h_mod = h @ wi
        return adj @ h_lin + deg_imp * h_mod

    def leaky(h):
        return jnp.where(h >= 0, h, beta * h)

    h = leaky(conv(x, params["w1"], params["b1"], params["wi1"]))
    h = leaky(conv(h, params["w2"], params["b2"], params["wi2"]))
    h = conv(h, params["w3"], params["b3"], params["wi3"])
    return h @ params["wfc"] + params["bfc"]


def _init_params(key, input_dim, hidden_dim1, hidden_dim2, output_dim):
    keys = jax.random.split(key, 11)

    def w(k, shape, scale=0.2):
        return (scale * jax.random.normal(k, shape)).astype(jnp.float32)

    return {
        "w1": w(keys[0], (input_dim, hidden_dim1)),
        "b1": w(keys[1], (1, hidden_dim1)),
        "wi1": w(keys[2], (input_dim, hidden_dim1)),
        "w2": w(keys[3], (hidden_dim1, hidden_dim2)),
        "b2": w(keys[4], (1, hidden_dim2)),
        "wi2": w(keys[5], (hidden_dim1, hidden_dim2)),
        "w3": w(keys[6], (hidden_dim2, output_dim)),
        "b3": w(keys[7], (1, output_dim)),
        "wi3": w(keys[8], (hidden_dim2, output_dim)),
        "wfc": w(keys[9], (hidden_dim2, 1)),
        "bfc": w(keys[10], (1, 1)),
    }


if __name__ == "__main__":
    input_dim = 3
    hidden_dim1 = 33
    hidden_dim2 = 33
    output_dim = hidden_dim2   # see TODO(synk): keeps fc(hidden_dim2, 1) applicable
    beta = 0.2

    key = jax.random.PRNGKey(0)
    k_x, k_imp, k_param, k_e1, k_e2, k_x2, k_imp2 = jax.random.split(key, 7)
    params = _init_params(k_param, input_dim, hidden_dim1, hidden_dim2,
                          output_dim)

    def check(out, x, edge_index, impedance, n):
        adj = jnp.zeros((n, n), jnp.float32).at[
            edge_index[1], edge_index[0]].add(1.0)
        ref = _reference_forward(x, adj, impedance, params, beta)
        assert out.shape == (n, 1)
        max_ref = float(jnp.max(jnp.abs(ref)))
        max_err = float(jnp.max(jnp.abs(out - ref)))
        assert max_err <= 0.05 * max_ref + 1e-3, (
            f"mismatch: max_err={max_err}, max_ref={max_ref}")

    # --- small graph: exercises the fused single-kernel path --------------
    n1 = 16
    x1 = jax.random.normal(k_x, (n1, input_dim), dtype=jnp.float32)
    imp1 = jax.random.uniform(k_imp, (n1, 1), dtype=jnp.float32,
                              minval=0.1, maxval=1.0)
    ring_src = list(range(n1))
    ring_tgt = [(i + 1) % n1 for i in range(n1)]
    src1 = ring_src + ring_tgt + [0, 3, 5, 8]
    tgt1 = ring_tgt + ring_src + [7, 12, 10, 1]
    ei1 = jnp.array([src1, tgt1], dtype=jnp.int32)

    out1 = jax.block_until_ready(impedance_aware_gcn(x1, ei1, imp1, params, beta))
    check(out1, x1, ei1, imp1, n1)

    # --- medium graph: force the tiled/streamed path (multi row & K steps) -
    n2, e2 = 300, 1200
    x2 = jax.random.normal(k_x2, (n2, input_dim), dtype=jnp.float32)
    imp2 = jax.random.uniform(k_imp2, (n2, 1), dtype=jnp.float32,
                              minval=0.1, maxval=1.0)
    src2 = jax.random.randint(k_e1, (e2,), 0, n2, dtype=jnp.int32)
    tgt2 = jax.random.randint(k_e2, (e2,), 0, n2, dtype=jnp.int32)
    ei2 = jnp.stack([src2, tgt2])

    out2 = jax.block_until_ready(
        impedance_aware_gcn(x2, ei2, imp2, params, beta,
                            force_tiled=True, tile_n=256, tile_k=128))
    check(out2, x2, ei2, imp2, n2)

    print("KERNEL_OK")
</pallas_src>

<mosaic_0001>
module attributes {stable_mosaic.version = 11 : i64} {
  func.func @_fused_gcn_kernel(%arg0: i32, %arg1: memref<128x128xi8, #tpu.memory_space<vmem>>, %arg2: memref<128x128xbf16, #tpu.memory_space<vmem>>, %arg3: memref<1x128x128xbf16, #tpu.memory_space<vmem>>, %arg4: memref<1x1x128xf32, #tpu.memory_space<vmem>>, %arg5: memref<1x128x128xbf16, #tpu.memory_space<vmem>>, %arg6: memref<128x128xbf16, #tpu.memory_space<vmem>>, %arg7: memref<1x128xf32, #tpu.memory_space<vmem>>, %arg8: memref<128x128xf32, #tpu.memory_space<vmem>>, %arg9: memref<128x128xf32, #tpu.memory_space<vmem>>) attributes {dimension_semantics = [#tpu.dimension_semantics<arbitrary>], iteration_bounds = array<i64: 3>, scalar_prefetch = 0 : i64, scratch_operands = 1 : i64, tpu.core_type = #tpu.core_type<tc>, window_params = [{pipeline_mode = #tpu.pipeline_mode<synchronous>, transform_indices = @transform_0, window_bounds = array<i64: 128, 128>}, {pipeline_mode = #tpu.pipeline_mode<synchronous>, transform_indices = @transform_1, window_bounds = array<i64: 128, 128>}, {transform_indices = @transform_2, window_bounds = array<i64: 1, 128, 128>}, {transform_indices = @transform_3, window_bounds = array<i64: 1, 1, 128>}, {transform_indices = @transform_4, window_bounds = array<i64: 1, 128, 128>}, {pipeline_mode = #tpu.pipeline_mode<synchronous>, transform_indices = @transform_5, window_bounds = array<i64: 128, 128>}, {pipeline_mode = #tpu.pipeline_mode<synchronous>, transform_indices = @transform_6, window_bounds = array<i64: 1, 128>}, {pipeline_mode = #tpu.pipeline_mode<synchronous>, transform_indices = @transform_7, window_bounds = array<i64: 128, 128>}]} {
    %c0_i32 = arith.constant 0 : i32
    %0 = arith.cmpi eq, %arg0, %c0_i32 : i32
    %1 = arith.extui %0 : i1 to i32
    %c0_i32_0 = arith.constant 0 : i32
    %2 = arith.cmpi ne, %1, %c0_i32_0 : i32
    scf.if %2 {
      %c0_21 = arith.constant 0 : index
      %c0_22 = arith.constant 0 : index
      %45 = vector.load %arg2[%c0_21, %c0_22] : memref<128x128xbf16, #tpu.memory_space<vmem>>, vector<128x128xbf16>
      %46 = arith.extf %45 : vector<128x128xbf16> to vector<128x128xf32>
      %c0_23 = arith.constant 0 : index
      %c0_24 = arith.constant 0 : index
      %47 = vector.load %arg9[%c0_23, %c0_24] : memref<128x128xf32, #tpu.memory_space<vmem>>, vector<128x128xf32>
      tpu.vector_store %arg9[%c0_23, %c0_24], %46 {strides = array<i32>} : memref<128x128xf32, #tpu.memory_space<vmem>>, vector<128x128xf32>,
    } else {
    }
    %c0 = arith.constant 0 : index
    %c0_1 = arith.constant 0 : index
    %3 = vector.load %arg9[%c0, %c0_1] : memref<128x128xf32, #tpu.memory_space<vmem>>, vector<128x128xf32>
    %4 = arith.truncf %3 : vector<128x128xf32> to vector<128x128xbf16>
    %c0_2 = arith.constant 0 : index
    %c0_3 = arith.constant 0 : index
    %5 = vector.load %arg1[%c0_2, %c0_3] : memref<128x128xi8, #tpu.memory_space<vmem>>, vector<128x128xi8>
    %6 = arith.sitofp %5 : vector<128x128xi8> to vector<128x128xbf16>
    %cst = arith.constant dense<0.000000e+00> : vector<128x128xf32>
    %7 = tpu.matmul %6, %4, %cst {dimension_numbers = #tpu.dot_dimension_numbers<[1], [0], [0], [1], [0, 0, 1, 1], [], []>} : vector<128x128xbf16>, vector<128x128xbf16>, vector<128x128xf32> -> vector<128x128xf32>
    %8 = vector.extract_strided_slice %7 {offsets = [0, 127], sizes = [128, 1], strides = [1, 1]} : vector<128x128xf32> to vector<128x1xf32>
    %9 = vector.extract_strided_slice %7 {offsets = [0, 126], sizes = [128, 1], strides = [1, 1]} : vector<128x128xf32> to vector<128x1xf32>
    %10 = arith.truncf %7 : vector<128x128xf32> to vector<128x128xbf16>
    %c0_4 = arith.constant 0 : index
    %c0_5 = arith.constant 0 : index
    %c0_6 = arith.constant 0 : index
    %11 = vector.load %arg3[%c0_4, %c0_5, %c0_6] : memref<1x128x128xbf16, #tpu.memory_space<vmem>>, vector<1x128x128xbf16>
    %12 = vector.shape_cast %11 : vector<1x128x128xbf16> to vector<128x128xbf16>
    %cst_7 = arith.constant dense<0.000000e+00> : vector<128x128xf32>
    %13 = tpu.matmul %10, %12, %cst_7 {dimension_numbers = #tpu.dot_dimension_numbers<[1], [0], [0], [1], [0, 0, 1, 1], [], []>} : vector<128x128xbf16>, vector<128x128xbf16>, vector<128x128xf32> -> vector<128x128xf32>
    %c0_8 = arith.constant 0 : index
    %c0_9 = arith.constant 0 : index
    %c0_10 = arith.constant 0 : index
    %14 = vector.load %arg4[%c0_8, %c0_9, %c0_10] : memref<1x1x128xf32, #tpu.memory_space<vmem>>, vector<1x1x128xf32>
    %15 = vector.shape_cast %14 : vector<1x1x128xf32> to vector<1x128xf32>
    %16 = vector.broadcast %8 : vector<128x1xf32> to vector<128x128xf32>
    %17 = vector.broadcast %15 : vector<1x128xf32> to vector<128x128xf32>
    %18 = arith.mulf %16, %17 : vector<128x128xf32>
    %19 = arith.addf %13, %18 : vector<128x128xf32>
    %c0_11 = arith.constant 0 : index
    %c0_12 = arith.constant 0 : index
    %c0_13 = arith.constant 0 : index
    %20 = vector.load %arg5[%c0_11, %c0_12, %c0_13] : memref<1x128x128xbf16, #tpu.memory_space<vmem>>, vector<1x128x128xbf16>
    %21 = vector.shape_cast %20 : vector<1x128x128xbf16> to vector<128x128xbf16>
    %cst_14 = arith.constant dense<0.000000e+00> : vector<128x128xf32>
    %22 = tpu.matmul %4, %21, %cst_14 {dimension_numbers = #tpu.dot_dimension_numbers<[1], [0], [0], [1], [0, 0, 1, 1], [], []>} : vector<128x128xbf16>, vector<128x128xbf16>, vector<128x128xf32> -> vector<128x128xf32>
    %23 = vector.broadcast %9 : vector<128x1xf32> to vector<128x128xf32>
    %24 = arith.mulf %23, %22 : vector<128x128xf32>
    %25 = arith.addf %19, %24 : vector<128x128xf32>
    %cst_15 = arith.constant 0.000000e+00 : f32
    %26 = vector.broadcast %cst_15 : f32 to vector<128x128xf32>
    %27 = arith.cmpf olt, %25, %26 : vector<128x128xf32>
    %c2_i32 = arith.constant 2 : i32
    %28 = arith.cmpi slt, %arg0, %c2_i32 : i32
    %29 = vector.broadcast %28 : i1 to vector<128x128xi1>
    %30 = arith.andi %27, %29 : vector<128x128xi1>
    %cst_16 = arith.constant 2.000000e-01 : f32
    %31 = vector.broadcast %cst_16 : f32 to vector<128x128xf32>
    %32 = arith.mulf %31, %25 : vector<128x128xf32>
    %33 = arith.select %30, %32, %25 : vector<128x128xi1>, vector<128x128xf32>
    %34 = tpu.iota {dimensions = array<i32: 1>} : vector<128x128xi32>
    %c126_i32 = arith.constant 126 : i32
    %35 = vector.broadcast %c126_i32 : i32 to vector<128x128xi32>
    %36 = arith.cmpi eq, %34, %35 : vector<128x128xi32>
    %c127_i32 = arith.constant 127 : i32
    %37 = vector.broadcast %c127_i32 : i32 to vector<128x128xi32>
    %38 = arith.cmpi eq, %34, %37 : vector<128x128xi32>
    %39 = arith.ori %36, %38 : vector<128x128xi1>
    %40 = arith.select %39, %3, %33 : vector<128x128xi1>, vector<128x128xf32>
    %c0_17 = arith.constant 0 : index
    %c0_18 = arith.constant 0 : index
    %41 = vector.load %arg9[%c0_17, %c0_18] : memref<128x128xf32, #tpu.memory_space<vmem>>, vector<128x128xf32>
    tpu.vector_store %arg9[%c0_17, %c0_18], %40 {strides = array<i32>} : memref<128x128xf32, #tpu.memory_space<vmem>>, vector<128x128xf32>,
    %c2_i32_19 = arith.constant 2 : i32
    %42 = arith.cmpi eq, %arg0, %c2_i32_19 : i32
    %43 = arith.extui %42 : i1 to i32
    %c0_i32_20 = arith.constant 0 : i32
    %44 = arith.cmpi ne, %43, %c0_i32_20 : i32
    scf.if %44 {
      %45 = arith.truncf %33 : vector<128x128xf32> to vector<128x128xbf16>
      %c0_21 = arith.constant 0 : index
      %c0_22 = arith.constant 0 : index
      %46 = vector.load %arg6[%c0_21, %c0_22] : memref<128x128xbf16, #tpu.memory_space<vmem>>, vector<128x128xbf16>
      %cst_23 = arith.constant dense<0.000000e+00> : vector<128x128xf32>
      %47 = tpu.matmul %45, %46, %cst_23 {dimension_numbers = #tpu.dot_dimension_numbers<[1], [0], [0], [1], [0, 0, 1, 1], [], []>} : vector<128x128xbf16>, vector<128x128xbf16>, vector<128x128xf32> -> vector<128x128xf32>
      %c0_24 = arith.constant 0 : index
      %c0_25 = arith.constant 0 : index
      %48 = vector.load %arg7[%c0_24, %c0_25] : memref<1x128xf32, #tpu.memory_space<vmem>>, vector<1x128xf32>
      %49 = vector.broadcast %48 : vector<1x128xf32> to vector<128x128xf32>
      %50 = arith.addf %47, %49 : vector<128x128xf32>
      %c0_26 = arith.constant 0 : index
      %c0_27 = arith.constant 0 : index
      %51 = vector.load %arg8[%c0_26, %c0_27] : memref<128x128xf32, #tpu.memory_space<vmem>>, vector<128x128xf32>
      tpu.vector_store %arg8[%c0_26, %c0_27], %50 {strides = array<i32>} : memref<128x128xf32, #tpu.memory_space<vmem>>, vector<128x128xf32>,
    } else {
    }
    return
  }
  func.func @transform_0(%arg0: i32) -> (i32, i32) {
    %c0_i32 = arith.constant 0 : i32
    %c0_i32_0 = arith.constant 0 : i32
    %c0_i32_1 = arith.constant 0 : i32
    return %c0_i32, %c0_i32_0 : i32, i32
  }
  func.func @transform_1(%arg0: i32) -> (i32, i32) {
    %c0_i32 = arith.constant 0 : i32
    %c0_i32_0 = arith.constant 0 : i32
    %c0_i32_1 = arith.constant 0 : i32
    return %c0_i32, %c0_i32_0 : i32, i32
  }
  func.func @transform_2(%arg0: i32) -> (i32, i32, i32) {
    %c0_i32 = arith.constant 0 : i32
    %c0_i32_0 = arith.constant 0 : i32
    %c0_i32_1 = arith.constant 0 : i32
    return %arg0, %c0_i32, %c0_i32_0 : i32, i32, i32
  }
  func.func @transform_3(%arg0: i32) -> (i32, i32, i32) {
    %c0_i32 = arith.constant 0 : i32
    %c0_i32_0 = arith.constant 0 : i32
    %c0_i32_1 = arith.constant 0 : i32
    return %arg0, %c0_i32, %c0_i32_0 : i32, i32, i32
  }
  func.func @transform_4(%arg0: i32) -> (i32, i32, i32) {
    %c0_i32 = arith.constant 0 : i32
    %c0_i32_0 = arith.constant 0 : i32
    %c0_i32_1 = arith.constant 0 : i32
    return %arg0, %c0_i32, %c0_i32_0 : i32, i32, i32
  }
  func.func @transform_5(%arg0: i32) -> (i32, i32) {
    %c0_i32 = arith.constant 0 : i32
    %c0_i32_0 = arith.constant 0 : i32
    %c0_i32_1 = arith.constant 0 : i32
    return %c0_i32, %c0_i32_0 : i32, i32
  }
  func.func @transform_6(%arg0: i32) -> (i32, i32) {
    %c0_i32 = arith.constant 0 : i32
    %c0_i32_0 = arith.constant 0 : i32
    %c0_i32_1 = arith.constant 0 : i32
    return %c0_i32, %c0_i32_0 : i32, i32
  }
  func.func @transform_7(%arg0: i32) -> (i32, i32) {
    %c0_i32 = arith.constant 0 : i32
    %c0_i32_0 = arith.constant 0 : i32
    %c0_i32_1 = arith.constant 0 : i32
    return %c0_i32, %c0_i32_0 : i32, i32
  }
}

</mosaic_0001>

<llo_original>
// kernel: tpu_custom_call.1
$region0: #{tpu_custom_call.1}
  #allocation0 [shape = 'u32[]', space=smem, size = 0x4, offset = 0x4, fixed_abs, tag = 'smem constant byte address 0x4 - core index']
  #allocation1 [shape = 'u32[144,128]{1,0:T(1,128)}', space=vmem, size = 0x12000, scoped, tag = 'internal scratch']
  #allocation2 [shape = 'f32[128,128]{1,0:T(8,128)}', space=vmem, size = 0x10000, scoped, tag = 'scratch operand']
  %s0 = inlined_call_operand.hbm [shape: s8[128,128], index: 0, kind: input, shape index: {}]
  %s1 = inlined_call_operand.hbm [shape: bf16[128,128], index: 1, kind: input, shape index: {}]
  %s2 = inlined_call_operand.hbm [shape: bf16[3,128,128], index: 2, kind: input, shape index: {}]
  %s3 = inlined_call_operand.vmem [shape: f32[3,1,128], index: 3, kind: input, shape index: {}]
  %s4 = inlined_call_operand.hbm [shape: bf16[3,128,128], index: 4, kind: input, shape index: {}]
  %s5 = inlined_call_operand.hbm [shape: bf16[128,128], index: 5, kind: input, shape index: {}]
  %s6 = inlined_call_operand.vmem [shape: f32[1,128], index: 6, kind: input, shape index: {}]
  %s7 = inlined_call_operand.hbm [shape: f32[128,128], index: 7, kind: output, shape index: {}]
  %s8 = sld [smem:[#allocation0]]
  $region89: #{tpu_custom_call.1} parent=0
    _
  %s10 = ssub.s32 1, %s8
  %s11 = scalar_select 0, %s10, %s8
  $region1: #{tpu_custom_call.1} parent=0
    #allocation3 [shape = 'u8[16384]{0}', space=vmem, size = 0x4000, scoped, tag = 'input window, operand 0, single buffered']
    #allocation4 [shape = 's32[2]{0}', space=sflag, size = 0x8, scoped, tag = 'scoped memory for tpu_custom_call.1']
    #allocation5 [shape = 's32[2]{0}', space=sflag, size = 0x8, scoped, tag = 'scoped memory for tpu_custom_call.1']
    #allocation6 [shape = 'u8[32768]{0}', space=vmem, size = 0x8000, scoped, tag = 'input window, operand 1, single buffered']
    #allocation7 [shape = 's32[1]{0}', space=sflag, size = 0x4, scoped, tag = 'scoped memory for tpu_custom_call.1']
    #allocation8 [shape = 'u8[65536]{0}', space=vmem, size = 0x10000, scoped, tag = 'input window, operand 2']
    #allocation9 [shape = 'u8[65536]{0}', space=vmem, size = 0x10000, scoped, tag = 'input window, operand 4']
    #allocation10 [shape = 'u8[32768]{0}', space=vmem, size = 0x8000, scoped, tag = 'input window, operand 5, single buffered']
    #allocation11 [shape = 'u8[65536]{0}', space=vmem, size = 0x10000, scoped, tag = 'output window, operand 0, single buffered']
    %12 = vsyncpa [#allocation4], 0
    %13 = vsyncpa [#allocation7], 0
    %14 = vsyncpa [#allocation5], 0
    loop: start=0, step=1, limit=5
    $region2: #{tpu_custom_call.1} parent=1 // loop_pre_header
      _
    $region3: #{tpu_custom_call.1} parent=1 // loop_header
      %s16 = sphi 0, %s20
      %p17 = scmp.ge.s32.totalorder %s16, 5
      %s24 = sphi 0, %s24
      %s26 = sphi 0, %s24
      %s27 = sphi 0, %s26
      %s41 = sphi 0, %s27
      %s45 = sphi 0, %s45
      %s47 = sphi 0, %s45
      %s48 = sphi 0, %s47
      %s62 = sphi 0, %s48
      %s68 = sphi 0, %s70
      %s71 = sphi 0, %s68
      %s72 = sphi 0, %s71
      %s88 = sphi 0, %s72
      %s94 = sphi 0, %s96
      %s97 = sphi 0, %s94
      %s98 = sphi 0, %s97
      %s114 = sphi 0, %s98
      %s120 = sphi 0, %s122
      %s123 = sphi 0, %s120
      %s124 = sphi 0, %s123
      %s140 = sphi 0, %s124
      %s144 = sphi 0, %s144
      %s146 = sphi 0, %s144
      %s147 = sphi 0, %s146
      %s161 = sphi 0, %s147
      %s165 = sphi 0, %s165
      %s167 = sphi 0, %s165
      %s168 = sphi 0, %s167
      %s182 = sphi 0, %s168
      %s186 = sphi 0, %s186
      %s188 = sphi 0, %s186
      %s189 = sphi 0, %s188
      %s203 = sphi 0, %s189
    $region4: #{tpu_custom_call.1} parent=1 // loop_header_branch
      %19 = sbr.rel (%p17) target = $region8
    $region5: #{tpu_custom_call.1} parent=1 // loop_body
      %s21 = ssub.s32 %s16, 1
      %s22 = ssub.s32 %s16, 2
      %s23 = sadd.s32 %s16, 1
      %s25 = sadd.s32 %s24, 1
      %p28 = scmp.eq.s32.totalorder %s16, 2
      %p29 = scmp.ne.s32.totalorder %s24, %s26
      %p30 = scmp.eq.s32.totalorder %s16, 0
      %p31 = por %p29, %p30
      %p32 = scmp.ne.s32.totalorder %s24, %s26
      %p33 = scmp.eq.s32.totalorder %s21, 2
      %p34 = por %p32, %p33
      %p35 = scmp.ne.s32.totalorder %s26, %s27
      %p36 = scmp.eq.s32.totalorder %s21, 0
      %p37 = por %p35, %p36
      %p38 = scmp.ne.s32.totalorder %s26, %s27
      %p39 = scmp.eq.s32.totalorder %s22, 2
      %p40 = por %p38, %p39
      %p42 = scmp.ne.s32.totalorder %s27, %s41
      %p43 = scmp.eq.s32.totalorder %s22, 0
      %p44 = por %p42, %p43
      %s46 = sadd.s32 %s45, 1
      %p49 = scmp.eq.s32.totalorder %s16, 2
      %p50 = scmp.ne.s32.totalorder %s45, %s47
      %p51 = scmp.eq.s32.totalorder %s16, 0
      %p52 = por %p50, %p51
      %p53 = scmp.ne.s32.totalorder %s45, %s47
      %p54 = scmp.eq.s32.totalorder %s21, 2
      %p55 = por %p53, %p54
      %p56 = scmp.ne.s32.totalorder %s47, %s48
      %p57 = scmp.eq.s32.totalorder %s21, 0
      %p58 = por %p56, %p57
      %p59 = scmp.ne.s32.totalorder %s47, %s48
      %p60 = scmp.eq.s32.totalorder %s22, 2
      %p61 = por %p59, %p60
      %p63 = scmp.ne.s32.totalorder %s48, %s62
      %p64 = scmp.eq.s32.totalorder %s22, 0
      %p65 = por %p63, %p64
      %s66 = ssub.s32 %s16, %s23
      %p67 = scmp.eq.s32.totalorder %s66, 0
      %s69 = sadd.s32 %s68, 1
      %s70 = scalar_select %p67, %s68, %s69
      %p73 = pneg %p67
      %p74 = scmp.eq.s32.totalorder %s16, 2
      %p75 = por %p73, %p74
      %p76 = scmp.ne.s32.totalorder %s68, %s71
      %p77 = scmp.eq.s32.totalorder %s16, 0
      %p78 = por %p76, %p77
      %p79 = scmp.ne.s32.totalorder %s68, %s71
      %p80 = scmp.eq.s32.totalorder %s21, 2
      %p81 = por %p79, %p80
      %p82 = scmp.ne.s32.totalorder %s71, %s72
      %p83 = scmp.eq.s32.totalorder %s21, 0
      %p84 = por %p82, %p83
      %p85 = scmp.ne.s32.totalorder %s71, %s72
      %p86 = scmp.eq.s32.totalorder %s22, 2
      %p87 = por %p85, %p86
      %p89 = scmp.ne.s32.totalorder %s72, %s88
      %p90 = scmp.eq.s32.totalorder %s22, 0
      %p91 = por %p89, %p90
      %s92 = ssub.s32 %s16, %s23
      %p93 = scmp.eq.s32.totalorder %s92, 0
      %s95 = sadd.s32 %s94, 1
      %s96 = scalar_select %p93, %s94, %s95
      %p99 = pneg %p93
      %p100 = scmp.eq.s32.totalorder %s16, 2
      %p101 = por %p99, %p100
      %p102 = scmp.ne.s32.totalorder %s94, %s97
      %p103 = scmp.eq.s32.totalorder %s16, 0
      %p104 = por %p102, %p103
      %p105 = scmp.ne.s32.totalorder %s94, %s97
      %p106 = scmp.eq.s32.totalorder %s21, 2
      %p107 = por %p105, %p106
      %p108 = scmp.ne.s32.totalorder %s97, %s98
      %p109 = scmp.eq.s32.totalorder %s21, 0
      %p110 = por %p108, %p109
      %p111 = scmp.ne.s32.totalorder %s97, %s98
      %p112 = scmp.eq.s32.totalorder %s22, 2
      %p113 = por %p111, %p112
      %p115 = scmp.ne.s32.totalorder %s98, %s114
      %p116 = scmp.eq.s32.totalorder %s22, 0
      %p117 = por %p115, %p116
      %s118 = ssub.s32 %s16, %s23
      %p119 = scmp.eq.s32.totalorder %s118, 0
      %s121 = sadd.s32 %s120, 1
      %s122 = scalar_select %p119, %s120, %s121
      %p125 = pneg %p119
      %p126 = scmp.eq.s32.totalorder %s16, 2
      %p127 = por %p125, %p126
      %p128 = scmp.ne.s32.totalorder %s120, %s123
      %p129 = scmp.eq.s32.totalorder %s16, 0
      %p130 = por %p128, %p129
      %p131 = scmp.ne.s32.totalorder %s120, %s123
      %p132 = scmp.eq.s32.totalorder %s21, 2
      %p133 = por %p131, %p132
      %p134 = scmp.ne.s32.totalorder %s123, %s124
      %p135 = scmp.eq.s32.totalorder %s21, 0
      %p136 = por %p134, %p135
      %p137 = scmp.ne.s32.totalorder %s123, %s124
      %p138 = scmp.eq.s32.totalorder %s22, 2
      %p139 = por %p137, %p138
      %p141 = scmp.ne.s32.totalorder %s124, %s140
      %p142 = scmp.eq.s32.totalorder %s22, 0
      %p143 = por %p141, %p142
      %s145 = sadd.s32 %s144, 1
      %p148 = scmp.eq.s32.totalorder %s16, 2
      %p149 = scmp.ne.s32.totalorder %s144, %s146
      %p150 = scmp.eq.s32.totalorder %s16, 0
      %p151 = por %p149, %p150
      %p152 = scmp.ne.s32.totalorder %s144, %s146
      %p153 = scmp.eq.s32.totalorder %s21, 2
      %p154 = por %p152, %p153
      %p155 = scmp.ne.s32.totalorder %s146, %s147
      %p156 = scmp.eq.s32.totalorder %s21, 0
      %p157 = por %p155, %p156
      %p158 = scmp.ne.s32.totalorder %s146, %s147
      %p159 = scmp.eq.s32.totalorder %s22, 2
      %p160 = por %p158, %p159
      %p162 = scmp.ne.s32.totalorder %s147, %s161
      %p163 = scmp.eq.s32.totalorder %s22, 0
      %p164 = por %p162, %p163
      %s166 = sadd.s32 %s165, 1
      %p169 = scmp.eq.s32.totalorder %s16, 2
      %p170 = scmp.ne.s32.totalorder %s165, %s167
      %p171 = scmp.eq.s32.totalorder %s16, 0
      %p172 = por %p170, %p171
      %p173 = scmp.ne.s32.totalorder %s165, %s167
      %p174 = scmp.eq.s32.totalorder %s21, 2
      %p175 = por %p173, %p174
      %p176 = scmp.ne.s32.totalorder %s167, %s168
      %p177 = scmp.eq.s32.totalorder %s21, 0
      %p178 = por %p176, %p177
      %p179 = scmp.ne.s32.totalorder %s167, %s168
      %p180 = scmp.eq.s32.totalorder %s22, 2
      %p181 = por %p179, %p180
      %p183 = scmp.ne.s32.totalorder %s168, %s182
      %p184 = scmp.eq.s32.totalorder %s22, 0
      %p185 = por %p183, %p184
      %s187 = sadd.s32 %s186, 1
      %p190 = scmp.eq.s32.totalorder %s16, 2
      %p191 = scmp.ne.s32.totalorder %s186, %s188
      %p192 = scmp.eq.s32.totalorder %s16, 0
      %p193 = por %p191, %p192
      %p194 = scmp.ne.s32.totalorder %s186, %s188
      %p195 = scmp.eq.s32.totalorder %s21, 2
      %p196 = por %p194, %p195
      %p197 = scmp.ne.s32.totalorder %s188, %s189
      %p198 = scmp.eq.s32.totalorder %s21, 0
      %p199 = por %p197, %p198
      %p200 = scmp.ne.s32.totalorder %s188, %s189
      %p201 = scmp.eq.s32.totalorder %s22, 2
      %p202 = por %p200, %p201
      %p204 = scmp.ne.s32.totalorder %s189, %s203
      %p205 = scmp.eq.s32.totalorder %s22, 0
      %p206 = por %p204, %p205
      %p207 = scmp.le.s32.totalorder 1, %s16
      %p208 = scmp.lt.s32.totalorder %s16, 4
      %p209 = pnand %p207, %p208
      %p210 = pneg %p209
      // Predicated region
      $region9: #{tpu_custom_call.1} parent=5 // pred_check
        _
      $region10: #{tpu_custom_call.1} parent=5 // pred_check_branch
        %212 = sbr.rel (%p209) target = $region12
      $region11: #{tpu_custom_call.1} parent=5 // pred_region
        %s213 = ssub.s32 %s16, 1
        // Predicated region
        $region13: #{tpu_custom_call.1} parent=11 // pred_check
          %p214 = pneg %p37
        $region14: #{tpu_custom_call.1} parent=11 // pred_check_branch
          %216 = sbr.rel (%p214) target = $region16
        $region15: #{tpu_custom_call.1} parent=11 // pred_region
          %s218 = ssub.s32 512, 512
          %219 = vsyncadd [#allocation4], %s218
          %s220 = sshll.u32 [#allocation3], 4
          %s221 = int_to_ptr.vmem [resolvable:$true] %s220
          %226 = dma.hbm_to_vmem [thread:$0]  %s0, 512, %s221, [#allocation4], 128, 128, 8
        $region16: #{tpu_custom_call.1} parent=11 // pred_fallthru
          _
        // Predicated region
        $region17: #{tpu_custom_call.1} parent=11 // pred_check
          %p227 = pneg %p58
        $region18: #{tpu_custom_call.1} parent=11 // pred_check_branch
          %229 = sbr.rel (%p227) target = $region20
        $region19: #{tpu_custom_call.1} parent=11 // pred_region
          %s231 = ssub.s32 1024, 1024
          %232 = vsyncadd [#allocation7], %s231
          %s233 = sshll.u32 [#allocation6], 4
          %s234 = int_to_ptr.vmem [resolvable:$true] %s233
          %239 = dma.hbm_to_vmem [thread:$0]  %s1, 1024, %s234, [#allocation7], 64, 64, 4
        $region20: #{tpu_custom_call.1} parent=11 // pred_fallthru
          _
        // Predicated region
        $region21: #{tpu_custom_call.1} parent=11 // pred_check
          %p240 = pneg %p157
        $region22: #{tpu_custom_call.1} parent=11 // pred_check_branch
          %242 = sbr.rel (%p240) target = $region24
        $region23: #{tpu_custom_call.1} parent=11 // pred_region
          %s244 = ssub.s32 1024, 1024
          %245 = vsyncadd [#allocation7], %s244
          %s246 = sshll.u32 [#allocation10], 4
          %s247 = int_to_ptr.vmem [resolvable:$true] %s246
          %252 = dma.hbm_to_vmem [thread:$0]  %s5, 1024, %s247, [#allocation7], 64, 64, 4
        $region24: #{tpu_custom_call.1} parent=11 // pred_fallthru
          _
        // Predicated region
        $region25: #{tpu_custom_call.1} parent=11 // pred_check
          %p253 = pneg %p178
        $region26: #{tpu_custom_call.1} parent=11 // pred_check_branch
          %255 = sbr.rel (%p253) target = $region28
        $region27: #{tpu_custom_call.1} parent=11 // pred_region
          _
        $region28: #{tpu_custom_call.1} parent=11 // pred_fallthru
          _
      $region12: #{tpu_custom_call.1} parent=5 // pred_fallthru
        _
      %p256 = scmp.lt.s32.totalorder %s16, 3
      // Predicated region
      $region29: #{tpu_custom_call.1} parent=5 // pred_check
        %p257 = pneg %p256
      $region30: #{tpu_custom_call.1} parent=5 // pred_check_branch
        %259 = sbr.rel (%p257) target = $region32
      $region31: #{tpu_custom_call.1} parent=5 // pred_region
        // Predicated region
        $region33: #{tpu_custom_call.1} parent=31 // pred_check
          %p260 = pneg %p78
        $region34: #{tpu_custom_call.1} parent=31 // pred_check_branch
          %262 = sbr.rel (%p260) target = $region36
        $region35: #{tpu_custom_call.1} parent=31 // pred_region
          %s263 = sand.u32 %s16, 1
          %s264 = scalar_lea.sflag [#allocation4], %s263
          %s265 = sand.u32 %s68, 1
          %s266 = smul.addr %s265, 64
          %s267 = scalar_lea.vmem [#allocation8], %s266
          %s269 = ssub.s32 1024, 1024
          %270 = vsyncadd %s264, %s269
          %s271 = smul.addr %s16, 16
          %s272 = smul.addr %s271, 64
          %s273 = scalar_lea.hbm %s2, %s272
          %s274 = sshll.u32 %s267, 4
          %s275 = int_to_ptr.vmem [resolvable:$true] %s274
          %280 = dma.hbm_to_vmem [thread:$0]  %s273, 1024, %s275, %s264, 64, 64, 4
        $region36: #{tpu_custom_call.1} parent=31 // pred_fallthru
          _
        // Predicated region
        $region37: #{tpu_custom_call.1} parent=31 // pred_check
          %p281 = pneg %p104
        $region38: #{tpu_custom_call.1} parent=31 // pred_check_branch
          %283 = sbr.rel (%p281) target = $region40
        $region39: #{tpu_custom_call.1} parent=31 // pred_region
          %p284 = scmp.lt.s32.totalorder %s16, 2
          %s285 = scalar_select %p284, %s16, 2
          %s286 = scalar_lea.vmem %s3, %s285
        $region40: #{tpu_custom_call.1} parent=31 // pred_fallthru
          _
        // Predicated region
        $region41: #{tpu_custom_call.1} parent=31 // pred_check
          %p287 = pneg %p130
        $region42: #{tpu_custom_call.1} parent=31 // pred_check_branch
          %289 = sbr.rel (%p287) target = $region44
        $region43: #{tpu_custom_call.1} parent=31 // pred_region
          %s290 = sand.u32 %s16, 1
          %s291 = scalar_lea.sflag [#allocation4], %s290
          %s292 = sand.u32 %s120, 1
          %s293 = smul.addr %s292, 64
          %s294 = scalar_lea.vmem [#allocation9], %s293
          %s296 = ssub.s32 1024, 1024
          %297 = vsyncadd %s291, %s296
          %s298 = smul.addr %s16, 16
          %s299 = smul.addr %s298, 64
          %s300 = scalar_lea.hbm %s4, %s299
          %s301 = sshll.u32 %s294, 4
          %s302 = int_to_ptr.vmem [resolvable:$true] %s301
          %307 = dma.hbm_to_vmem [thread:$0]  %s300, 1024, %s302, %s291, 64, 64, 4
        $region44: #{tpu_custom_call.1} parent=31 // pred_fallthru
          _
      $region32: #{tpu_custom_call.1} parent=5 // pred_fallthru
        _
      %p308 = scmp.le.s32.totalorder 1, %s16
      %p309 = scmp.lt.s32.totalorder %s16, 4
      %p310 = pnand %p308, %p309
      %p311 = pneg %p310
      // Predicated region
      $region45: #{tpu_custom_call.1} parent=5 // pred_check
        _
      $region46: #{tpu_custom_call.1} parent=5 // pred_check_branch
        %313 = sbr.rel (%p310) target = $region48
      $region47: #{tpu_custom_call.1} parent=5 // pred_region
        %s314 = ssub.s32 %s16, 1
        // Predicated region
        $region49: #{tpu_custom_call.1} parent=47 // pred_check
          %p315 = pneg %p37
        $region50: #{tpu_custom_call.1} parent=47 // pred_check_branch
          %317 = sbr.rel (%p315) target = $region52
        $region51: #{tpu_custom_call.1} parent=47 // pred_region
          %318 = dma.done [#allocation4], 512
        $region52: #{tpu_custom_call.1} parent=47 // pred_fallthru
          _
        // Predicated region
        $region53: #{tpu_custom_call.1} parent=47 // pred_check
          %p319 = pneg %p58
        $region54: #{tpu_custom_call.1} parent=47 // pred_check_branch
          %321 = sbr.rel (%p319) target = $region56
        $region55: #{tpu_custom_call.1} parent=47 // pred_region
          %322 = dma.done [#allocation7], 1024
        $region56: #{tpu_custom_call.1} parent=47 // pred_fallthru
          _
        %s323 = sand.u32 %s21, 1
        %s324 = scalar_lea.sflag [#allocation4], %s323
        %s325 = sand.u32 %s71, 1
        %s326 = smul.addr %s325, 64
        %s327 = scalar_lea.vmem [#allocation8], %s326
        // Predicated region
        $region57: #{tpu_custom_call.1} parent=47 // pred_check
          %p328 = pneg %p84
        $region58: #{tpu_custom_call.1} parent=47 // pred_check_branch
          %330 = sbr.rel (%p328) target = $region60
        $region59: #{tpu_custom_call.1} parent=47 // pred_region
          %331 = dma.done %s324, 1024
        $region60: #{tpu_custom_call.1} parent=47 // pred_fallthru
          _
        %s332 = sand.u32 %s21, 1
        %s333 = scalar_lea.sflag [#allocation4], %s332
        %s334 = sand.u32 %s123, 1
        %s335 = smul.addr %s334, 64
        %s336 = scalar_lea.vmem [#allocation9], %s335
        // Predicated region
        $region61: #{tpu_custom_call.1} parent=47 // pred_check
          %p337 = pneg %p136
        $region62: #{tpu_custom_call.1} parent=47 // pred_check_branch
          %339 = sbr.rel (%p337) target = $region64
        $region63: #{tpu_custom_call.1} parent=47 // pred_region
          %340 = dma.done %s333, 1024
        $region64: #{tpu_custom_call.1} parent=47 // pred_fallthru
          _
        // Predicated region
        $region65: #{tpu_custom_call.1} parent=47 // pred_check
          %p341 = pneg %p157
        $region66: #{tpu_custom_call.1} parent=47 // pred_check_branch
          %343 = sbr.rel (%p341) target = $region68
        $region67: #{tpu_custom_call.1} parent=47 // pred_region
          %344 = dma.done [#allocation7], 1024
        $region68: #{tpu_custom_call.1} parent=47 // pred_fallthru
          _
        %p345 = pneg %p37
        %p346 = pneg %p34
        %p347 = pneg %p58
        %p348 = pneg %p55
        %s349 = sand.u32 %s21, 1
        %s350 = scalar_lea.sflag [#allocation4], %s349
        %s351 = sand.u32 %s71, 1
        %s352 = smul.addr %s351, 64
        %s353 = scalar_lea.vmem [#allocation8], %s352
        %p354 = pneg %p84
        %p355 = pneg %p81
        %p356 = scmp.lt.s32.totalorder %s21, 2
        %s357 = scalar_select %p356, %s21, 2
        %s358 = scalar_lea.vmem %s3, %s357
        %p359 = pneg %p110
        %p360 = pneg %p107
        %s361 = sand.u32 %s21, 1
        %s362 = scalar_lea.sflag [#allocation4], %s361
        %s363 = sand.u32 %s123, 1
        %s364 = smul.addr %s363, 64
        %s365 = scalar_lea.vmem [#allocation9], %s364
        %p366 = pneg %p136
        %p367 = pneg %p133
        %p368 = pneg %p157
        %p369 = pneg %p154
        %p370 = pneg %p178
        %p371 = pneg %p175
        %p372 = pneg %p199
        %p373 = pneg %p196
        %p374 = scmp.lt.s32.totalorder %s21, 2
        %s375 = scalar_select %p374, %s21, 2
        %s376 = scalar_lea.vmem %s3, %s375
        %p378 = scmp.eq.s32.totalorder %s21, 0
        // Predicated region
        $region69: #{tpu_custom_call.1} parent=47 // pred_check
          %p379 = pneg %p378
        $region70: #{tpu_custom_call.1} parent=47 // pred_check_branch
          %381 = sbr.rel (%p379) target = $region72
        $region71: #{tpu_custom_call.1} parent=47 // pred_region
          %v382 = vld [vmem:[#allocation6] sm:$0xf]
          %v383 = vld [vmem:[#allocation6 + $0x4] sm:$0xf]
          %v384 = vld [vmem:[#allocation6 + $0x8] sm:$0xf]
          %v385 = vld [vmem:[#allocation6 + $0xc] sm:$0xf]
          %v386 = vld [vmem:[#allocation6 + $0x10] sm:$0xf]
          %v387 = vld [vmem:[#allocation6 + $0x14] sm:$0xf]
          %v388 = vld [vmem:[#allocation6 + $0x18] sm:$0xf]
          %v389 = vld [vmem:[#allocation6 + $0x1c] sm:$0xf]
          %v390 = vld [vmem:[#allocation6 + $0x20] sm:$0xf]
          %v391 = vld [vmem:[#allocation6 + $0x24] sm:$0xf]
          %v392 = vld [vmem:[#allocation6 + $0x28] sm:$0xf]
          %v393 = vld [vmem:[#allocation6 + $0x2c] sm:$0xf]
          %v394 = vld [vmem:[#allocation6 + $0x30] sm:$0xf]
          %v395 = vld [vmem:[#allocation6 + $0x34] sm:$0xf]
          %v396 = vld [vmem:[#allocation6 + $0x38] sm:$0xf]
          %v397 = vld [vmem:[#allocation6 + $0x3c] sm:$0xf]
          %v398 = vunpack.c.l.bf16 %v382
          %v399 = vunpack.c.l.bf16 %v383
          %v400 = vunpack.c.l.bf16 %v384
          %v401 = vunpack.c.l.bf16 %v385
          %v402 = vunpack.c.l.bf16 %v386
          %v403 = vunpack.c.l.bf16 %v387
          %v404 = vunpack.c.l.bf16 %v388
          %v405 = vunpack.c.l.bf16 %v389
          %v406 = vunpack.c.l.bf16 %v390
          %v407 = vunpack.c.l.bf16 %v391
          %v408 = vunpack.c.l.bf16 %v392
          %v409 = vunpack.c.l.bf16 %v393
          %v410 = vunpack.c.l.bf16 %v394
          %v411 = vunpack.c.l.bf16 %v395
          %v412 = vunpack.c.l.bf16 %v396
          %v413 = vunpack.c.l.bf16 %v397
          %414 = vst [vmem:[#allocation2] sm:$0xff] %v398
          %415 = vst [vmem:[#allocation2 + $0x8] sm:$0xff] %v399
          %416 = vst [vmem:[#allocation2 + $0x10] sm:$0xff] %v400
          %417 = vst [vmem:[#allocation2 + $0x18] sm:$0xff] %v401
          %418 = vst [vmem:[#allocation2 + $0x20] sm:$0xff] %v402
          %419 = vst [vmem:[#allocation2 + $0x28] sm:$0xff] %v403
          %420 = vst [vmem:[#allocation2 + $0x30] sm:$0xff] %v404
          %421 = vst [vmem:[#allocation2 + $0x38] sm:$0xff] %v405
          %422 = vst [vmem:[#allocation2 + $0x40] sm:$0xff] %v406
          %423 = vst [vmem:[#allocation2 + $0x48] sm:$0xff] %v407
          %424 = vst [vmem:[#allocation2 + $0x50] sm:$0xff] %v408
          %425 = vst [vmem:[#allocation2 + $0x58] sm:$0xff] %v409
          %426 = vst [vmem:[#allocation2 + $0x60] sm:$0xff] %v410
          %427 = vst [vmem:[#allocation2 + $0x68] sm:$0xff] %v411
          %428 = vst [vmem:[#allocation2 + $0x70] sm:$0xff] %v412
          %429 = vst [vmem:[#allocation2 + $0x78] sm:$0xff] %v413
        $region72: #{tpu_custom_call.1} parent=47 // pred_fallthru
          _
        %v430 = vld [vmem:[#allocation2] sm:$0xff]
        %v431 = vld [vmem:[#allocation2 + $0x8] sm:$0xff]
        %v432 = vld [vmem:[#allocation2 + $0x10] sm:$0xff]
        %v433 = vld [vmem:[#allocation2 + $0x18] sm:$0xff]
        %v434 = vld [vmem:[#allocation2 + $0x20] sm:$0xff]
        %v435 = vld [vmem:[#allocation2 + $0x28] sm:$0xff]
        %v436 = vld [vmem:[#allocation2 + $0x30] sm:$0xff]
        %v437 = vld [vmem:[#allocation2 + $0x38] sm:$0xff]
        %v438 = vld [vmem:[#allocation2 + $0x40] sm:$0xff]
        %v439 = vld [vmem:[#allocation2 + $0x48] sm:$0xff]
        %v440 = vld [vmem:[#allocation2 + $0x50] sm:$0xff]
        %v441 = vld [vmem:[#allocation2 + $0x58] sm:$0xff]
        %v442 = vld [vmem:[#allocation2 + $0x60] sm:$0xff]
        %v443 = vld [vmem:[#allocation2 + $0x68] sm:$0xff]
        %v444 = vld [vmem:[#allocation2 + $0x70] sm:$0xff]
        %v445 = vld [vmem:[#allocation2 + $0x78] sm:$0xff]
        %v446 = vpack.c.bf16 %v431, %v430
        %v447 = vpack.c.bf16 %v433, %v432
        %v448 = vpack.c.bf16 %v435, %v434
        %v449 = vpack.c.bf16 %v437, %v436
        %v450 = vpack.c.bf16 %v439, %v438
        %v451 = vpack.c.bf16 %v441, %v440
        %v452 = vpack.c.bf16 %v443, %v442
        %v453 = vpack.c.bf16 %v445, %v444
        %v454 = vld [vmem:[#allocation3] sm:$0xff]
        %v455 = vld [vmem:[#allocation3 + $0x8] sm:$0xff]
        %v456 = vld [vmem:[#allocation3 + $0x10] sm:$0xff]
        %v457 = vld [vmem:[#allocation3 + $0x18] sm:$0xff]
        %v458 = vunpack.c.l.s8.bf16 %v454
        %v459 = vunpack.c.h.s8.bf16 %v454
        %v460 = vunpack.c.l.s8.bf16 %v455
        %v461 = vunpack.c.h.s8.bf16 %v455
        %v462 = vunpack.c.l.s8.bf16 %v456
        %v463 = vunpack.c.h.s8.bf16 %v456
        %v464 = vunpack.c.l.s8.bf16 %v457
        %v465 = vunpack.c.h.s8.bf16 %v457
        %466 = vmatprep.subr.bf16.mxu0 0
        %467 = vmatpush1.bf16.msra.mxu0 %v446
        %468 = vmatprep.subr.bf16.mxu0 0
        %469 = vmatpush1.bf16.msra.mxu0 %v447
        %470 = vmatprep.subr.bf16.mxu0 0
        %471 = vmatpush1.bf16.msra.mxu0 %v448
        %472 = vmatprep.subr.bf16.mxu0 0
        %473 = vmatpush1.bf16.msra.mxu0 %v449
        %474 = vmatprep.subr.bf16.mxu0 0
        %475 = vmatpush1.bf16.msra.mxu0 %v450
        %476 = vmatprep.subr.bf16.mxu0 0
        %477 = vmatpush1.bf16.msra.mxu0 %v451
        %478 = vmatprep.subr.bf16.mxu0 0
        %479 = vmatpush1.bf16.msra.mxu0 %v452
        %480 = vmatprep.subr.bf16.mxu0 0
        %481 = vmatpush1.bf16.msra.mxu0 %v453
        %482 = vmatprep.subr.bf16.mxu0 0
        %483 = vmatpush1.bf16.msra.mxu0 0
        %484 = vmatprep.subr.bf16.mxu0 0
        %485 = vmatpush1.bf16.msra.mxu0 0
        %486 = vmatprep.subr.bf16.mxu0 0
        %487 = vmatpush1.bf16.msra.mxu0 0
        %488 = vmatprep.subr.bf16.mxu0 0
        %489 = vmatpush1.bf16.msra.mxu0 0
        %490 = vmatprep.subr.bf16.mxu0 0
        %491 = vmatpush1.bf16.msra.mxu0 0
        %492 = vmatprep.subr.bf16.mxu0 0
        %493 = vmatpush1.bf16.msra.mxu0 0
        %494 = vmatprep.subr.bf16.mxu0 0
        %495 = vmatpush1.bf16.msra.mxu0 0
        %496 = vmatprep.subr.bf16.mxu0 0
        %497 = vmatpush1.bf16.msra.mxu0 0
        %498 = vmatprep.mubr.bf16.mxu0 0
        %499 = vmatmul.mubr.bf16.gmra.mrb[0].mxu0 %v458
        %v500 = vpop.f32.mrb[0].mxu0
        %v501 = vadd.f32 0.0, %v500
        %v502 = vpop.f32.mrb[0].mxu0
        %v503 = vpop.f32.mrb[0].mxu0
        %v504 = vadd.f32 0.0, %v503
        %v505 = vpop.f32.mrb[0].mxu0
        %506 = vmatprep.mubr.bf16.mxu0 0
        %507 = vmatmul.mubr.bf16.gmra.mrb[0].mxu0 %v459
        %v508 = vpop.f32.mrb[0].mxu0
        %v509 = vadd.f32 0.0, %v508
        %v510 = vpop.f32.mrb[0].mxu0
        %v511 = vpop.f32.mrb[0].mxu0
        %v512 = vadd.f32 0.0, %v511
        %v513 = vpop.f32.mrb[0].mxu0
        %514 = vmatprep.mubr.bf16.mxu0 0
        %515 = vmatmul.mubr.bf16.gmra.mrb[0].mxu0 %v460
        %v516 = vpop.f32.mrb[0].mxu0
        %v517 = vadd.f32 0.0, %v516
        %v518 = vpop.f32.mrb[0].mxu0
        %v519 = vpop.f32.mrb[0].mxu0
        %v520 = vadd.f32 0.0, %v519
        %v521 = vpop.f32.mrb[0].mxu0
        %522 = vmatprep.mubr.bf16.mxu0 0
        %523 = vmatmul.mubr.bf16.gmra.mrb[0].mxu0 %v461
        %v524 = vpop.f32.mrb[0].mxu0
        %v525 = vadd.f32 0.0, %v524
        %v526 = vpop.f32.mrb[0].mxu0
        %v527 = vpop.f32.mrb[0].mxu0
        %v528 = vadd.f32 0.0, %v527
        %v529 = vpop.f32.mrb[0].mxu0
        %530 = vmatprep.mubr.bf16.mxu0 0
        %531 = vmatmul.mubr.bf16.gmra.mrb[0].mxu0 %v462
        %v532 = vpop.f32.mrb[0].mxu0
        %v533 = vadd.f32 0.0, %v532
        %v534 = vpop.f32.mrb[0].mxu0
        %v535 = vpop.f32.mrb[0].mxu0
        %v536 = vadd.f32 0.0, %v535
        %v537 = vpop.f32.mrb[0].mxu0
        %538 = vmatprep.mubr.bf16.mxu0 0
        %539 = vmatmul.mubr.bf16.gmra.mrb[0].mxu0 %v463
        %v540 = vpop.f32.mrb[0].mxu0
        %v541 = vadd.f32 0.0, %v540
        %v542 = vpop.f32.mrb[0].mxu0
        %v543 = vpop.f32.mrb[0].mxu0
        %v544 = vadd.f32 0.0, %v543
        %v545 = vpop.f32.mrb[0].mxu0
        %546 = vmatprep.mubr.bf16.mxu0 0
        %547 = vmatmul.mubr.bf16.gmra.mrb[0].mxu0 %v464
        %v548 = vpop.f32.mrb[0].mxu0
        %v549 = vadd.f32 0.0, %v548
        %v550 = vpop.f32.mrb[0].mxu0
        %v551 = vpop.f32.mrb[0].mxu0
        %v552 = vadd.f32 0.0, %v551
        %v553 = vpop.f32.mrb[0].mxu0
        %554 = vmatprep.mubr.bf16.mxu0 0
        %555 = vmatmul.mubr.bf16.gmra.mrb[0].mxu0 %v465
        %v556 = vpop.f32.mrb[0].mxu0
        %v557 = vadd.f32 0.0, %v556
        %v558 = vpop.f32.mrb[0].mxu0
        %v559 = vpop.f32.mrb[0].mxu0
        %v560 = vadd.f32 0.0, %v559
        %v561 = vpop.f32.mrb[0].mxu0
        %562 = vdwg.mxu0
        %v563 = vpack.c.bf16 %v504, %v501
        %v564 = vpack.c.bf16 %v512, %v509
        %v565 = vpack.c.bf16 %v520, %v517
        %v566 = vpack.c.bf16 %v528, %v525
        %v567 = vpack.c.bf16 %v536, %v533
        %v568 = vpack.c.bf16 %v544, %v541
        %v569 = vpack.c.bf16 %v552, %v549
        %v570 = vpack.c.bf16 %v560, %v557
        %v571 = vld [vmem:[%s327] sm:$0xf]
        %v572 = vld [vmem:[%s327 + $0x4] sm:$0xf]
        %v573 = vld [vmem:[%s327 + $0x8] sm:$0xf]
        %v574 = vld [vmem:[%s327 + $0xc] sm:$0xf]
        %v575 = vld [vmem:[%s327 + $0x10] sm:$0xf]
        %v576 = vld [vmem:[%s327 + $0x14] sm:$0xf]
        %v577 = vld [vmem:[%s327 + $0x18] sm:$0xf]
        %v578 = vld [vmem:[%s327 + $0x1c] sm:$0xf]
        %v579 = vld [vmem:[%s327 + $0x20] sm:$0xf]
        %v580 = vld [vmem:[%s327 + $0x24] sm:$0xf]
        %v581 = vld [vmem:[%s327 + $0x28] sm:$0xf]
        %v582 = vld [vmem:[%s327 + $0x2c] sm:$0xf]
        %v583 = vld [vmem:[%s327 + $0x30] sm:$0xf]
        %v584 = vld [vmem:[%s327 + $0x34] sm:$0xf]
        %v585 = vld [vmem:[%s327 + $0x38] sm:$0xf]
        %v586 = vld [vmem:[%s327 + $0x3c] sm:$0xf]
        %v587 = vld [vmem:[%s376] sm:$0x1]
        %589 = vset.pattern.permute.xlu0 127
        %590 = vperm.xlu0 %589, %v501
        %v591 = vpop.permute.xlu0 %590
        %594 = vset.pattern.permute.xlu0 127
        %595 = vperm.xlu0 %594, %v504
        %v596 = vpop.permute.xlu0 %595
        %599 = vset.pattern.permute.xlu0 127
        %600 = vperm.xlu0 %599, %v509
        %v601 = vpop.permute.xlu0 %600
        %604 = vset.pattern.permute.xlu0 127
        %605 = vperm.xlu0 %604, %v512
        %v606 = vpop.permute.xlu0 %605
        %609 = vset.pattern.permute.xlu0 127
        %610 = vperm.xlu0 %609, %v517
        %v611 = vpop.permute.xlu0 %610
        %614 = vset.pattern.permute.xlu0 127
        %615 = vperm.xlu0 %614, %v520
        %v616 = vpop.permute.xlu0 %615
        %619 = vset.pattern.permute.xlu0 127
        %620 = vperm.xlu0 %619, %v525
        %v621 = vpop.permute.xlu0 %620
        %624 = vset.pattern.permute.xlu0 127
        %625 = vperm.xlu0 %624, %v528
        %v626 = vpop.permute.xlu0 %625
        %629 = vset.pattern.permute.xlu0 127
        %630 = vperm.xlu0 %629, %v533
        %v631 = vpop.permute.xlu0 %630
        %634 = vset.pattern.permute.xlu0 127
        %635 = vperm.xlu0 %634, %v536
        %v636 = vpop.permute.xlu0 %635
        %639 = vset.pattern.permute.xlu0 127
        %640 = vperm.xlu0 %639, %v541
        %v641 = vpop.permute.xlu0 %640
        %644 = vset.pattern.permute.xlu0 127
        %645 = vperm.xlu0 %644, %v544
        %v646 = vpop.permute.xlu0 %645
        %649 = vset.pattern.permute.xlu0 127
        %650 = vperm.xlu0 %649, %v549
        %v651 = vpop.permute.xlu0 %650
        %654 = vset.pattern.permute.xlu0 127
        %655 = vperm.xlu0 %654, %v552
        %v656 = vpop.permute.xlu0 %655
        %659 = vset.pattern.permute.xlu0 127
        %660 = vperm.xlu0 %659, %v557
        %v661 = vpop.permute.xlu0 %660
        %664 = vset.pattern.permute.xlu0 127
        %665 = vperm.xlu0 %664, %v560
        %v666 = vpop.permute.xlu0 %665
        %v669 = vlaneseq
        %v670 = vshrl.u32 %v669, 7
        %v671 = vsub.s32 0, %v670
        %v672 = vrot.slane %v587, %v671
        %v674 = vmul.f32 %v591, %v672
        %v675 = vmul.f32 %v596, %v672
        %v676 = vmul.f32 %v601, %v672
        %v677 = vmul.f32 %v606, %v672
        %v678 = vmul.f32 %v611, %v672
        %v679 = vmul.f32 %v616, %v672
        %v680 = vmul.f32 %v621, %v672
        %v681 = vmul.f32 %v626, %v672
        %v682 = vmul.f32 %v631, %v672
        %v683 = vmul.f32 %v636, %v672
        %v684 = vmul.f32 %v641, %v672
        %v685 = vmul.f32 %v646, %v672
        %v686 = vmul.f32 %v651, %v672
        %v687 = vmul.f32 %v656, %v672
        %v688 = vmul.f32 %v661, %v672
        %v689 = vmul.f32 %v666, %v672
        %v706 = vunpack.c.l.b16 %v571
        %v707 = vunpack.c.l.b16 %v572
        %v708 = vunpack.c.l.b16 %v573
        %v709 = vunpack.c.l.b16 %v574
        %v710 = vunpack.c.l.b16 %v575
        %v711 = vunpack.c.l.b16 %v576
        %v712 = vunpack.c.l.b16 %v577
        %v713 = vunpack.c.l.b16 %v578
        %v714 = vunpack.c.l.b16 %v579
        %v715 = vunpack.c.l.b16 %v580
        %v716 = vunpack.c.l.b16 %v581
        %v717 = vunpack.c.l.b16 %v582
        %v718 = vunpack.c.l.b16 %v583
        %v719 = vunpack.c.l.b16 %v584
        %v720 = vunpack.c.l.b16 %v585
        %v721 = vunpack.c.l.b16 %v586
        %v722 = vpack.c.b16 %v707, %v706
        %v723 = vpack.c.b16 %v709, %v708
        %v724 = vpack.c.b16 %v711, %v710
        %v725 = vpack.c.b16 %v713, %v712
        %v726 = vpack.c.b16 %v715, %v714
        %v727 = vpack.c.b16 %v717, %v716
        %v728 = vpack.c.b16 %v719, %v718
        %v729 = vpack.c.b16 %v721, %v720
        %738 = vmatprep.subr.bf16.mxu0 0
        %739 = vmatpush1.bf16.msra.mxu0 %v722
        %740 = vmatprep.subr.bf16.mxu0 0
        %741 = vmatpush1.bf16.msra.mxu0 %v723
        %742 = vmatprep.subr.bf16.mxu0 0
        %743 = vmatpush1.bf16.msra.mxu0 %v724
        %744 = vmatprep.subr.bf16.mxu0 0
        %745 = vmatpush1.bf16.msra.mxu0 %v725
        %746 = vmatprep.subr.bf16.mxu0 0
        %747 = vmatpush1.bf16.msra.mxu0 %v726
        %748 = vmatprep.subr.bf16.mxu0 0
        %749 = vmatpush1.bf16.msra.mxu0 %v727
        %750 = vmatprep.subr.bf16.mxu0 0
        %751 = vmatpush1.bf16.msra.mxu0 %v728
        %752 = vmatprep.subr.bf16.mxu0 0
        %753 = vmatpush1.bf16.msra.mxu0 %v729
        %754 = vmatprep.subr.bf16.mxu0 0
        %755 = vmatpush1.bf16.msra.mxu0 0
        %756 = vmatprep.subr.bf16.mxu0 0
        %757 = vmatpush1.bf16.msra.mxu0 0
        %758 = vmatprep.subr.bf16.mxu0 0
        %759 = vmatpush1.bf16.msra.mxu0 0
        %760 = vmatprep.subr.bf16.mxu0 0
        %761 = vmatpush1.bf16.msra.mxu0 0
        %762 = vmatprep.subr.bf16.mxu0 0
        %763 = vmatpush1.bf16.msra.mxu0 0
        %764 = vmatprep.subr.bf16.mxu0 0
        %765 = vmatpush1.bf16.msra.mxu0 0
        %766 = vmatprep.subr.bf16.mxu0 0
        %767 = vmatpush1.bf16.msra.mxu0 0
        %768 = vmatprep.subr.bf16.mxu0 0
        %769 = vmatpush1.bf16.msra.mxu0 0
        %770 = vmatprep.mubr.bf16.mxu0 0
        %771 = vmatmul.mubr.bf16.gmra.mrb[0].mxu0 %v563
        %v772 = vpop.f32.mrb[0].mxu0
        %v773 = vadd.f32 %v674, %v772
        %v774 = vpop.f32.mrb[0].mxu0
        %v775 = vpop.f32.mrb[0].mxu0
        %v776 = vadd.f32 %v675, %v775
        %v777 = vpop.f32.mrb[0].mxu0
        %778 = vmatprep.mubr.bf16.mxu0 0
        %779 = vmatmul.mubr.bf16.gmra.mrb[0].mxu0 %v564
        %v780 = vpop.f32.mrb[0].mxu0
        %v781 = vadd.f32 %v676, %v780
        %v782 = vpop.f32.mrb[0].mxu0
        %v783 = vpop.f32.mrb[0].mxu0
        %v784 = vadd.f32 %v677, %v783
        %v785 = vpop.f32.mrb[0].mxu0
        %786 = vmatprep.mubr.bf16.mxu0 0
        %787 = vmatmul.mubr.bf16.gmra.mrb[0].mxu0 %v565
        %v788 = vpop.f32.mrb[0].mxu0
        %v789 = vadd.f32 %v678, %v788
        %v790 = vpop.f32.mrb[0].mxu0
        %v791 = vpop.f32.mrb[0].mxu0
        %v792 = vadd.f32 %v679, %v791
        %v793 = vpop.f32.mrb[0].mxu0
        %794 = vmatprep.mubr.bf16.mxu0 0
        %795 = vmatmul.mubr.bf16.gmra.mrb[0].mxu0 %v566
        %v796 = vpop.f32.mrb[0].mxu0
        %v797 = vadd.f32 %v680, %v796
        %v798 = vpop.f32.mrb[0].mxu0
        %v799 = vpop.f32.mrb[0].mxu0
        %v800 = vadd.f32 %v681, %v799
        %v801 = vpop.f32.mrb[0].mxu0
        %802 = vmatprep.mubr.bf16.mxu0 0
        %803 = vmatmul.mubr.bf16.gmra.mrb[0].mxu0 %v567
        %v804 = vpop.f32.mrb[0].mxu0
        %v805 = vadd.f32 %v682, %v804
        %v806 = vpop.f32.mrb[0].mxu0
        %v807 = vpop.f32.mrb[0].mxu0
        %v808 = vadd.f32 %v683, %v807
        %v809 = vpop.f32.mrb[0].mxu0
        %810 = vmatprep.mubr.bf16.mxu0 0
        %811 = vmatmul.mubr.bf16.gmra.mrb[0].mxu0 %v568
        %v812 = vpop.f32.mrb[0].mxu0
        %v813 = vadd.f32 %v684, %v812
        %v814 = vpop.f32.mrb[0].mxu0
        %v815 = vpop.f32.mrb[0].mxu0
        %v816 = vadd.f32 %v685, %v815
        %v817 = vpop.f32.mrb[0].mxu0
        %818 = vmatprep.mubr.bf16.mxu0 0
        %819 = vmatmul.mubr.bf16.gmra.mrb[0].mxu0 %v569
        %v820 = vpop.f32.mrb[0].mxu0
        %v821 = vadd.f32 %v686, %v820
        %v822 = vpop.f32.mrb[0].mxu0
        %v823 = vpop.f32.mrb[0].mxu0
        %v824 = vadd.f32 %v687, %v823
        %v825 = vpop.f32.mrb[0].mxu0
        %826 = vmatprep.mubr.bf16.mxu0 0
        %827 = vmatmul.mubr.bf16.gmra.mrb[0].mxu0 %v570
        %v828 = vpop.f32.mrb[0].mxu0
        %v829 = vadd.f32 %v688, %v828
        %v830 = vpop.f32.mrb[0].mxu0
        %v831 = vpop.f32.mrb[0].mxu0
        %v832 = vadd.f32 %v689, %v831
        %v833 = vpop.f32.mrb[0].mxu0
        %834 = vdwg.mxu0
        %v835 = vld [vmem:[%s336] sm:$0xf]
        %v836 = vld [vmem:[%s336 + $0x4] sm:$0xf]
        %v837 = vld [vmem:[%s336 + $0x8] sm:$0xf]
        %v838 = vld [vmem:[%s336 + $0xc] sm:$0xf]
        %v839 = vld [vmem:[%s336 + $0x10] sm:$0xf]
        %v840 = vld [vmem:[%s336 + $0x14] sm:$0xf]
        %v841 = vld [vmem:[%s336 + $0x18] sm:$0xf]
        %v842 = vld [vmem:[%s336 + $0x1c] sm:$0xf]
        %v843 = vld [vmem:[%s336 + $0x20] sm:$0xf]
        %v844 = vld [vmem:[%s336 + $0x24] sm:$0xf]
        %v845 = vld [vmem:[%s336 + $0x28] sm:$0xf]
        %v846 = vld [vmem:[%s336 + $0x2c] sm:$0xf]
        %v847 = vld [vmem:[%s336 + $0x30] sm:$0xf]
        %v848 = vld [vmem:[%s336 + $0x34] sm:$0xf]
        %v849 = vld [vmem:[%s336 + $0x38] sm:$0xf]
        %v850 = vld [vmem:[%s336 + $0x3c] sm:$0xf]
        %v867 = vunpack.c.l.b16 %v835
        %v868 = vunpack.c.l.b16 %v836
        %v869 = vunpack.c.l.b16 %v837
        %v870 = vunpack.c.l.b16 %v838
        %v871 = vunpack.c.l.b16 %v839
        %v872 = vunpack.c.l.b16 %v840
        %v873 = vunpack.c.l.b16 %v841
        %v874 = vunpack.c.l.b16 %v842
        %v875 = vunpack.c.l.b16 %v843
        %v876 = vunpack.c.l.b16 %v844
        %v877 = vunpack.c.l.b16 %v845
        %v878 = vunpack.c.l.b16 %v846
        %v879 = vunpack.c.l.b16 %v847
        %v880 = vunpack.c.l.b16 %v848
        %v881 = vunpack.c.l.b16 %v849
        %v882 = vunpack.c.l.b16 %v850
        %v883 = vpack.c.b16 %v868, %v867
        %v884 = vpack.c.b16 %v870, %v869
        %v885 = vpack.c.b16 %v872, %v871
        %v886 = vpack.c.b16 %v874, %v873
        %v887 = vpack.c.b16 %v876, %v875
        %v888 = vpack.c.b16 %v878, %v877
        %v889 = vpack.c.b16 %v880, %v879
        %v890 = vpack.c.b16 %v882, %v881
        %899 = vmatprep.subr.bf16.mxu0 0
        %900 = vmatpush1.bf16.msra.mxu0 %v883
        %901 = vmatprep.subr.bf16.mxu0 0
        %902 = vmatpush1.bf16.msra.mxu0 %v884
        %903 = vmatprep.subr.bf16.mxu0 0
        %904 = vmatpush1.bf16.msra.mxu0 %v885
        %905 = vmatprep.subr.bf16.mxu0 0
        %906 = vmatpush1.bf16.msra.mxu0 %v886
        %907 = vmatprep.subr.bf16.mxu0 0
        %908 = vmatpush1.bf16.msra.mxu0 %v887
        %909 = vmatprep.subr.bf16.mxu0 0
        %910 = vmatpush1.bf16.msra.mxu0 %v888
        %911 = vmatprep.subr.bf16.mxu0 0
        %912 = vmatpush1.bf16.msra.mxu0 %v889
        %913 = vmatprep.subr.bf16.mxu0 0
        %914 = vmatpush1.bf16.msra.mxu0 %v890
        %915 = vmatprep.subr.bf16.mxu0 0
        %916 = vmatpush1.bf16.msra.mxu0 0
        %917 = vmatprep.subr.bf16.mxu0 0
        %918 = vmatpush1.bf16.msra.mxu0 0
        %919 = vmatprep.subr.bf16.mxu0 0
        %920 = vmatpush1.bf16.msra.mxu0 0
        %921 = vmatprep.subr.bf16.mxu0 0
        %922 = vmatpush1.bf16.msra.mxu0 0
        %923 = vmatprep.subr.bf16.mxu0 0
        %924 = vmatpush1.bf16.msra.mxu0 0
        %925 = vmatprep.subr.bf16.mxu0 0
        %926 = vmatpush1.bf16.msra.mxu0 0
        %927 = vmatprep.subr.bf16.mxu0 0
        %928 = vmatpush1.bf16.msra.mxu0 0
        %929 = vmatprep.subr.bf16.mxu0 0
        %930 = vmatpush1.bf16.msra.mxu0 0
        %931 = vmatprep.mubr.bf16.mxu0 0
        %932 = vmatmul.mubr.bf16.gmra.mrb[0].mxu0 %v446
        %v933 = vpop.f32.mrb[0].mxu0
        %v934 = vadd.f32 0.0, %v933
        %v935 = vpop.f32.mrb[0].mxu0
        %v936 = vpop.f32.mrb[0].mxu0
        %v937 = vadd.f32 0.0, %v936
        %v938 = vpop.f32.mrb[0].mxu0
        %939 = vmatprep.mubr.bf16.mxu0 0
        %940 = vmatmul.mubr.bf16.gmra.mrb[0].mxu0 %v447
        %v941 = vpop.f32.mrb[0].mxu0
        %v942 = vadd.f32 0.0, %v941
        %v943 = vpop.f32.mrb[0].mxu0
        %v944 = vpop.f32.mrb[0].mxu0
        %v945 = vadd.f32 0.0, %v944
        %v946 = vpop.f32.mrb[0].mxu0
        %947 = vmatprep.mubr.bf16.mxu0 0
        %948 = vmatmul.mubr.bf16.gmra.mrb[0].mxu0 %v448
        %v949 = vpop.f32.mrb[0].mxu0
        %v950 = vadd.f32 0.0, %v949
        %v951 = vpop.f32.mrb[0].mxu0
        %v952 = vpop.f32.mrb[0].mxu0
        %v953 = vadd.f32 0.0, %v952
        %v954 = vpop.f32.mrb[0].mxu0
        %955 = vmatprep.mubr.bf16.mxu0 0
        %956 = vmatmul.mubr.bf16.gmra.mrb[0].mxu0 %v449
        %v957 = vpop.f32.mrb[0].mxu0
        %v958 = vadd.f32 0.0, %v957
        %v959 = vpop.f32.mrb[0].mxu0
        %v960 = vpop.f32.mrb[0].mxu0
        %v961 = vadd.f32 0.0, %v960
        %v962 = vpop.f32.mrb[0].mxu0
        %963 = vmatprep.mubr.bf16.mxu0 0
        %964 = vmatmul.mubr.bf16.gmra.mrb[0].mxu0 %v450
        %v965 = vpop.f32.mrb[0].mxu0
        %v966 = vadd.f32 0.0, %v965
        %v967 = vpop.f32.mrb[0].mxu0
        %v968 = vpop.f32.mrb[0].mxu0
        %v969 = vadd.f32 0.0, %v968
        %v970 = vpop.f32.mrb[0].mxu0
        %971 = vmatprep.mubr.bf16.mxu0 0
        %972 = vmatmul.mubr.bf16.gmra.mrb[0].mxu0 %v451
        %v973 = vpop.f32.mrb[0].mxu0
        %v974 = vadd.f32 0.0, %v973
        %v975 = vpop.f32.mrb[0].mxu0
        %v976 = vpop.f32.mrb[0].mxu0
        %v977 = vadd.f32 0.0, %v976
        %v978 = vpop.f32.mrb[0].mxu0
        %979 = vmatprep.mubr.bf16.mxu0 0
        %980 = vmatmul.mubr.bf16.gmra.mrb[0].mxu0 %v452
        %v981 = vpop.f32.mrb[0].mxu0
        %v982 = vadd.f32 0.0, %v981
        %v983 = vpop.f32.mrb[0].mxu0
        %v984 = vpop.f32.mrb[0].mxu0
        %v985 = vadd.f32 0.0, %v984
        %v986 = vpop.f32.mrb[0].mxu0
        %987 = vmatprep.mubr.bf16.mxu0 0
        %988 = vmatmul.mubr.bf16.gmra.mrb[0].mxu0 %v453
        %v989 = vpop.f32.mrb[0].mxu0
        %v990 = vadd.f32 0.0, %v989
        %v991 = vpop.f32.mrb[0].mxu0
        %v992 = vpop.f32.mrb[0].mxu0
        %v993 = vadd.f32 0.0, %v992
        %v994 = vpop.f32.mrb[0].mxu0
        %995 = vdwg.mxu0
        %996 = vset.pattern.permute.xlu0 126
        %997 = vperm.xlu0 %996, %v501
        %v998 = vpop.permute.xlu0 %997
        %1000 = vset.pattern.permute.xlu0 126
        %1001 = vperm.xlu0 %1000, %v504
        %v1002 = vpop.permute.xlu0 %1001
        %1004 = vset.pattern.permute.xlu0 126
        %1005 = vperm.xlu0 %1004, %v509
        %v1006 = vpop.permute.xlu0 %1005
        %1008 = vset.pattern.permute.xlu0 126
        %1009 = vperm.xlu0 %1008, %v512
        %v1010 = vpop.permute.xlu0 %1009
        %1012 = vset.pattern.permute.xlu0 126
        %1013 = vperm.xlu0 %1012, %v517
        %v1014 = vpop.permute.xlu0 %1013
        %1016 = vset.pattern.permute.xlu0 126
        %1017 = vperm.xlu0 %1016, %v520
        %v1018 = vpop.permute.xlu0 %1017
        %1020 = vset.pattern.permute.xlu0 126
        %1021 = vperm.xlu0 %1020, %v525
        %v1022 = vpop.permute.xlu0 %1021
        %1024 = vset.pattern.permute.xlu0 126
        %1025 = vperm.xlu0 %1024, %v528
        %v1026 = vpop.permute.xlu0 %1025
        %1028 = vset.pattern.permute.xlu0 126
        %1029 = vperm.xlu0 %1028, %v533
        %v1030 = vpop.permute.xlu0 %1029
        %1032 = vset.pattern.permute.xlu0 126
        %1033 = vperm.xlu0 %1032, %v536
        %v1034 = vpop.permute.xlu0 %1033
        %1036 = vset.pattern.permute.xlu0 126
        %1037 = vperm.xlu0 %1036, %v541
        %v1038 = vpop.permute.xlu0 %1037
        %1040 = vset.pattern.permute.xlu0 126
        %1041 = vperm.xlu0 %1040, %v544
        %v1042 = vpop.permute.xlu0 %1041
        %1044 = vset.pattern.permute.xlu0 126
        %1045 = vperm.xlu0 %1044, %v549
        %v1046 = vpop.permute.xlu0 %1045
        %1048 = vset.pattern.permute.xlu0 126
        %1049 = vperm.xlu0 %1048, %v552
        %v1050 = vpop.permute.xlu0 %1049
        %1052 = vset.pattern.permute.xlu0 126
        %1053 = vperm.xlu0 %1052, %v557
        %v1054 = vpop.permute.xlu0 %1053
        %1056 = vset.pattern.permute.xlu0 126
        %1057 = vperm.xlu0 %1056, %v560
        %v1058 = vpop.permute.xlu0 %1057
        %v1060 = vmul.f32 %v998, %v934
        %v1061 = vmul.f32 %v1002, %v937
        %v1062 = vmul.f32 %v1006, %v942
        %v1063 = vmul.f32 %v1010, %v945
        %v1064 = vmul.f32 %v1014, %v950
        %v1065 = vmul.f32 %v1018, %v953
        %v1066 = vmul.f32 %v1022, %v958
        %v1067 = vmul.f32 %v1026, %v961
        %v1068 = vmul.f32 %v1030, %v966
        %v1069 = vmul.f32 %v1034, %v969
        %v1070 = vmul.f32 %v1038, %v974
        %v1071 = vmul.f32 %v1042, %v977
        %v1072 = vmul.f32 %v1046, %v982
        %v1073 = vmul.f32 %v1050, %v985
        %v1074 = vmul.f32 %v1054, %v990
        %v1075 = vmul.f32 %v1058, %v993
        %v1076 = vadd.f32 %v773, %v1060
        %v1077 = vadd.f32 %v776, %v1061
        %v1078 = vadd.f32 %v781, %v1062
        %v1079 = vadd.f32 %v784, %v1063
        %v1080 = vadd.f32 %v789, %v1064
        %v1081 = vadd.f32 %v792, %v1065
        %v1082 = vadd.f32 %v797, %v1066
        %v1083 = vadd.f32 %v800, %v1067
        %v1084 = vadd.f32 %v805, %v1068
        %v1085 = vadd.f32 %v808, %v1069
        %v1086 = vadd.f32 %v813, %v1070
        %v1087 = vadd.f32 %v816, %v1071
        %v1088 = vadd.f32 %v821, %v1072
        %v1089 = vadd.f32 %v824, %v1073
        %v1090 = vadd.f32 %v829, %v1074
        %v1091 = vadd.f32 %v832, %v1075
        %vm1092 = vcmp.lt.f32.partialorder %v1076, 0.0
        %vm1093 = vcmp.lt.f32.partialorder %v1077, 0.0
        %vm1094 = vcmp.lt.f32.partialorder %v1078, 0.0
        %vm1095 = vcmp.lt.f32.partialorder %v1079, 0.0
        %vm1096 = vcmp.lt.f32.partialorder %v1080, 0.0
        %vm1097 = vcmp.lt.f32.partialorder %v1081, 0.0
        %vm1098 = vcmp.lt.f32.partialorder %v1082, 0.0
        %vm1099 = vcmp.lt.f32.partialorder %v1083, 0.0
        %vm1100 = vcmp.lt.f32.partialorder %v1084, 0.0
        %vm1101 = vcmp.lt.f32.partialorder %v1085, 0.0
        %vm1102 = vcmp.lt.f32.partialorder %v1086, 0.0
        %vm1103 = vcmp.lt.f32.partialorder %v1087, 0.0
        %vm1104 = vcmp.lt.f32.partialorder %v1088, 0.0
        %vm1105 = vcmp.lt.f32.partialorder %v1089, 0.0
        %vm1106 = vcmp.lt.f32.partialorder %v1090, 0.0
        %vm1107 = vcmp.lt.f32.partialorder %v1091, 0.0
        %p1108 = scmp.lt.s32.totalorder %s21, 2
        %s1109 = scalar_select %p1108, 1, 0
        %v1110 = vstv %s1109
        %vm1111 = vcmp.eq.s32.totalorder %v1110, 1
        %vm1112 = vmand %vm1092, %vm1111
        %vm1113 = vmand %vm1093, %vm1111
        %vm1114 = vmand %vm1094, %vm1111
        %vm1115 = vmand %vm1095, %vm1111
        %vm1116 = vmand %vm1096, %vm1111
        %vm1117 = vmand %vm1097, %vm1111
        %vm1118 = vmand %vm1098, %vm1111
        %vm1119 = vmand %vm1099, %vm1111
        %vm1120 = vmand %vm1100, %vm1111
        %vm1121 = vmand %vm1101, %vm1111
        %vm1122 = vmand %vm1102, %vm1111
        %vm1123 = vmand %vm1103, %vm1111
        %vm1124 = vmand %vm1104, %vm1111
        %vm1125 = vmand %vm1105, %vm1111
        %vm1126 = vmand %vm1106, %vm1111
        %vm1127 = vmand %vm1107, %vm1111
        %v1128 = vmul.f32 %v1076, 0.2
        %v1129 = vmul.f32 %v1077, 0.2
        %v1130 = vmul.f32 %v1078, 0.2
        %v1131 = vmul.f32 %v1079, 0.2
        %v1132 = vmul.f32 %v1080, 0.2
        %v1133 = vmul.f32 %v1081, 0.2
        %v1134 = vmul.f32 %v1082, 0.2
        %v1135 = vmul.f32 %v1083, 0.2
        %v1136 = vmul.f32 %v1084, 0.2
        %v1137 = vmul.f32 %v1085, 0.2
        %v1138 = vmul.f32 %v1086, 0.2
        %v1139 = vmul.f32 %v1087, 0.2
        %v1140 = vmul.f32 %v1088, 0.2
        %v1141 = vmul.f32 %v1089, 0.2
        %v1142 = vmul.f32 %v1090, 0.2
        %v1143 = vmul.f32 %v1091, 0.2
        %v1144 = vsel %vm1112, %v1128, %v1076
        %v1145 = vsel %vm1113, %v1129, %v1077
        %v1146 = vsel %vm1114, %v1130, %v1078
        %v1147 = vsel %vm1115, %v1131, %v1079
        %v1148 = vsel %vm1116, %v1132, %v1080
        %v1149 = vsel %vm1117, %v1133, %v1081
        %v1150 = vsel %vm1118, %v1134, %v1082
        %v1151 = vsel %vm1119, %v1135, %v1083
        %v1152 = vsel %vm1120, %v1136, %v1084
        %v1153 = vsel %vm1121, %v1137, %v1085
        %v1154 = vsel %vm1122, %v1138, %v1086
        %v1155 = vsel %vm1123, %v1139, %v1087
        %v1156 = vsel %vm1124, %v1140, %v1088
        %v1157 = vsel %vm1125, %v1141, %v1089
        %v1158 = vsel %vm1126, %v1142, %v1090
        %v1159 = vsel %vm1127, %v1143, %v1091
        %v1160 = vlaneseq
        %v1161 = vand.u32 %v1160, 127
        %vm1162 = vcmp.eq.s32.totalorder %v1161, 126
        %vm1163 = vcmp.eq.s32.totalorder %v1161, 127
        %vm1164 = vmor %vm1162, %vm1163
        %v1165 = vsel %vm1164, %v430, %v1144
        %v1166 = vsel %vm1164, %v431, %v1145
        %v1167 = vsel %vm1164, %v432, %v1146
        %v1168 = vsel %vm1164, %v433, %v1147
        %v1169 = vsel %vm1164, %v434, %v1148
        %v1170 = vsel %vm1164, %v435, %v1149
        %v1171 = vsel %vm1164, %v436, %v1150
        %v1172 = vsel %vm1164, %v437, %v1151
        %v1173 = vsel %vm1164, %v438, %v1152
        %v1174 = vsel %vm1164, %v439, %v1153
        %v1175 = vsel %vm1164, %v440, %v1154
        %v1176 = vsel %vm1164, %v441, %v1155
        %v1177 = vsel %vm1164, %v442, %v1156
        %v1178 = vsel %vm1164, %v443, %v1157
        %v1179 = vsel %vm1164, %v444, %v1158
        %v1180 = vsel %vm1164, %v445, %v1159
        %1181 = vst [vmem:[#allocation2] sm:$0xff] %v1165
        %1182 = vst [vmem:[#allocation2 + $0x8] sm:$0xff] %v1166
        %1183 = vst [vmem:[#allocation2 + $0x10] sm:$0xff] %v1167
        %1184 = vst [vmem:[#allocation2 + $0x18] sm:$0xff] %v1168
        %1185 = vst [vmem:[#allocation2 + $0x20] sm:$0xff] %v1169
        %1186 = vst [vmem:[#allocation2 + $0x28] sm:$0xff] %v1170
        %1187 = vst [vmem:[#allocation2 + $0x30] sm:$0xff] %v1171
        %1188 = vst [vmem:[#allocation2 + $0x38] sm:$0xff] %v1172
        %1189 = vst [vmem:[#allocation2 + $0x40] sm:$0xff] %v1173
        %1190 = vst [vmem:[#allocation2 + $0x48] sm:$0xff] %v1174
        %1191 = vst [vmem:[#allocation2 + $0x50] sm:$0xff] %v1175
        %1192 = vst [vmem:[#allocation2 + $0x58] sm:$0xff] %v1176
        %1193 = vst [vmem:[#allocation2 + $0x60] sm:$0xff] %v1177
        %1194 = vst [vmem:[#allocation2 + $0x68] sm:$0xff] %v1178
        %1195 = vst [vmem:[#allocation2 + $0x70] sm:$0xff] %v1179
        %1196 = vst [vmem:[#allocation2 + $0x78] sm:$0xff] %v1180
        %p1197 = scmp.eq.s32.totalorder %s21, 2
        // Predicated region
        $region73: #{tpu_custom_call.1} parent=47 // pred_check
          %p1198 = pneg %p1197
        $region74: #{tpu_custom_call.1} parent=47 // pred_check_branch
          %1200 = sbr.rel (%p1198) target = $region76
        $region75: #{tpu_custom_call.1} parent=47 // pred_region
          %v1201 = vpack.c.bf16 %v1145, %v1144
          %v1202 = vpack.c.bf16 %v1147, %v1146
          %v1203 = vpack.c.bf16 %v1149, %v1148
          %v1204 = vpack.c.bf16 %v1151, %v1150
          %v1205 = vpack.c.bf16 %v1153, %v1152
          %v1206 = vpack.c.bf16 %v1155, %v1154
          %v1207 = vpack.c.bf16 %v1157, %v1156
          %v1208 = vpack.c.bf16 %v1159, %v1158
          %v1209 = vld [vmem:[#allocation10] sm:$0xf]
          %v1210 = vld [vmem:[#allocation10 + $0x4] sm:$0xf]
          %v1211 = vld [vmem:[#allocation10 + $0x8] sm:$0xf]
          %v1212 = vld [vmem:[#allocation10 + $0xc] sm:$0xf]
          %v1213 = vld [vmem:[#allocation10 + $0x10] sm:$0xf]
          %v1214 = vld [vmem:[#allocation10 + $0x14] sm:$0xf]
          %v1215 = vld [vmem:[#allocation10 + $0x18] sm:$0xf]
          %v1216 = vld [vmem:[#allocation10 + $0x1c] sm:$0xf]
          %v1217 = vld [vmem:[#allocation10 + $0x20] sm:$0xf]
          %v1218 = vld [vmem:[#allocation10 + $0x24] sm:$0xf]
          %v1219 = vld [vmem:[#allocation10 + $0x28] sm:$0xf]
          %v1220 = vld [vmem:[#allocation10 + $0x2c] sm:$0xf]
          %v1221 = vld [vmem:[#allocation10 + $0x30] sm:$0xf]
          %v1222 = vld [vmem:[#allocation10 + $0x34] sm:$0xf]
          %v1223 = vld [vmem:[#allocation10 + $0x38] sm:$0xf]
          %v1224 = vld [vmem:[#allocation10 + $0x3c] sm:$0xf]
          %v1225 = vld [vmem:[%s6] sm:$0x1]
          %v1227 = vlaneseq
          %v1228 = vshrl.u32 %v1227, 7
          %v1229 = vsub.s32 0, %v1228
          %v1230 = vrot.slane %v1225, %v1229
          %v1248 = vunpack.c.l.b16 %v1209
          %v1249 = vunpack.c.l.b16 %v1210
          %v1250 = vunpack.c.l.b16 %v1211
          %v1251 = vunpack.c.l.b16 %v1212
          %v1252 = vunpack.c.l.b16 %v1213
          %v1253 = vunpack.c.l.b16 %v1214
          %v1254 = vunpack.c.l.b16 %v1215
          %v1255 = vunpack.c.l.b16 %v1216
          %v1256 = vunpack.c.l.b16 %v1217
          %v1257 = vunpack.c.l.b16 %v1218
          %v1258 = vunpack.c.l.b16 %v1219
          %v1259 = vunpack.c.l.b16 %v1220
          %v1260 = vunpack.c.l.b16 %v1221
          %v1261 = vunpack.c.l.b16 %v1222
          %v1262 = vunpack.c.l.b16 %v1223
          %v1263 = vunpack.c.l.b16 %v1224
          %v1264 = vpack.c.b16 %v1249, %v1248
          %v1265 = vpack.c.b16 %v1251, %v1250
          %v1266 = vpack.c.b16 %v1253, %v1252
          %v1267 = vpack.c.b16 %v1255, %v1254
          %v1268 = vpack.c.b16 %v1257, %v1256
          %v1269 = vpack.c.b16 %v1259, %v1258
          %v1270 = vpack.c.b16 %v1261, %v1260
          %v1271 = vpack.c.b16 %v1263, %v1262
          %1280 = vmatprep.subr.bf16.mxu0 0
          %1281 = vmatpush1.bf16.msra.mxu0 %v1264
          %1282 = vmatprep.subr.bf16.mxu0 0
          %1283 = vmatpush1.bf16.msra.mxu0 %v1265
          %1284 = vmatprep.subr.bf16.mxu0 0
          %1285 = vmatpush1.bf16.msra.mxu0 %v1266
          %1286 = vmatprep.subr.bf16.mxu0 0
          %1287 = vmatpush1.bf16.msra.mxu0 %v1267
          %1288 = vmatprep.subr.bf16.mxu0 0
          %1289 = vmatpush1.bf16.msra.mxu0 %v1268
          %1290 = vmatprep.subr.bf16.mxu0 0
          %1291 = vmatpush1.bf16.msra.mxu0 %v1269
          %1292 = vmatprep.subr.bf16.mxu0 0
          %1293 = vmatpush1.bf16.msra.mxu0 %v1270
          %1294 = vmatprep.subr.bf16.mxu0 0
          %1295 = vmatpush1.bf16.msra.mxu0 %v1271
          %1296 = vmatprep.subr.bf16.mxu0 0
          %1297 = vmatpush1.bf16.msra.mxu0 0
          %1298 = vmatprep.subr.bf16.mxu0 0
          %1299 = vmatpush1.bf16.msra.mxu0 0
          %1300 = vmatprep.subr.bf16.mxu0 0
          %1301 = vmatpush1.bf16.msra.mxu0 0
          %1302 = vmatprep.subr.bf16.mxu0 0
          %1303 = vmatpush1.bf16.msra.mxu0 0
          %1304 = vmatprep.subr.bf16.mxu0 0
          %1305 = vmatpush1.bf16.msra.mxu0 0
          %1306 = vmatprep.subr.bf16.mxu0 0
          %1307 = vmatpush1.bf16.msra.mxu0 0
          %1308 = vmatprep.subr.bf16.mxu0 0
          %1309 = vmatpush1.bf16.msra.mxu0 0
          %1310 = vmatprep.subr.bf16.mxu0 0
          %1311 = vmatpush1.bf16.msra.mxu0 0
          %1312 = vmatprep.mubr.bf16.mxu0 0
          %1313 = vmatmul.mubr.bf16.gmra.mrb[0].mxu0 %v1201
          %v1314 = vpop.f32.mrb[0].mxu0
          %v1315 = vadd.f32 %v1230, %v1314
          %v1316 = vpop.f32.mrb[0].mxu0
          %v1317 = vpop.f32.mrb[0].mxu0
          %v1318 = vadd.f32 %v1230, %v1317
          %v1319 = vpop.f32.mrb[0].mxu0
          %1320 = vmatprep.mubr.bf16.mxu0 0
          %1321 = vmatmul.mubr.bf16.gmra.mrb[0].mxu0 %v1202
          %v1322 = vpop.f32.mrb[0].mxu0
          %v1323 = vadd.f32 %v1230, %v1322
          %v1324 = vpop.f32.mrb[0].mxu0
          %v1325 = vpop.f32.mrb[0].mxu0
          %v1326 = vadd.f32 %v1230, %v1325
          %v1327 = vpop.f32.mrb[0].mxu0
          %1328 = vmatprep.mubr.bf16.mxu0 0
          %1329 = vmatmul.mubr.bf16.gmra.mrb[0].mxu0 %v1203
          %v1330 = vpop.f32.mrb[0].mxu0
          %v1331 = vadd.f32 %v1230, %v1330
          %v1332 = vpop.f32.mrb[0].mxu0
          %v1333 = vpop.f32.mrb[0].mxu0
          %v1334 = vadd.f32 %v1230, %v1333
          %v1335 = vpop.f32.mrb[0].mxu0
          %1336 = vmatprep.mubr.bf16.mxu0 0
          %1337 = vmatmul.mubr.bf16.gmra.mrb[0].mxu0 %v1204
          %v1338 = vpop.f32.mrb[0].mxu0
          %v1339 = vadd.f32 %v1230, %v1338
          %v1340 = vpop.f32.mrb[0].mxu0
          %v1341 = vpop.f32.mrb[0].mxu0
          %v1342 = vadd.f32 %v1230, %v1341
          %v1343 = vpop.f32.mrb[0].mxu0
          %1344 = vmatprep.mubr.bf16.mxu0 0
          %1345 = vmatmul.mubr.bf16.gmra.mrb[0].mxu0 %v1205
          %v1346 = vpop.f32.mrb[0].mxu0
          %v1347 = vadd.f32 %v1230, %v1346
          %v1348 = vpop.f32.mrb[0].mxu0
          %v1349 = vpop.f32.mrb[0].mxu0
          %v1350 = vadd.f32 %v1230, %v1349
          %v1351 = vpop.f32.mrb[0].mxu0
          %1352 = vmatprep.mubr.bf16.mxu0 0
          %1353 = vmatmul.mubr.bf16.gmra.mrb[0].mxu0 %v1206
          %v1354 = vpop.f32.mrb[0].mxu0
          %v1355 = vadd.f32 %v1230, %v1354
          %v1356 = vpop.f32.mrb[0].mxu0
          %v1357 = vpop.f32.mrb[0].mxu0
          %v1358 = vadd.f32 %v1230, %v1357
          %v1359 = vpop.f32.mrb[0].mxu0
          %1360 = vmatprep.mubr.bf16.mxu0 0
          %1361 = vmatmul.mubr.bf16.gmra.mrb[0].mxu0 %v1207
          %v1362 = vpop.f32.mrb[0].mxu0
          %v1363 = vadd.f32 %v1230, %v1362
          %v1364 = vpop.f32.mrb[0].mxu0
          %v1365 = vpop.f32.mrb[0].mxu0
          %v1366 = vadd.f32 %v1230, %v1365
          %v1367 = vpop.f32.mrb[0].mxu0
          %1368 = vmatprep.mubr.bf16.mxu0 0
          %1369 = vmatmul.mubr.bf16.gmra.mrb[0].mxu0 %v1208
          %v1370 = vpop.f32.mrb[0].mxu0
          %v1371 = vadd.f32 %v1230, %v1370
          %v1372 = vpop.f32.mrb[0].mxu0
          %v1373 = vpop.f32.mrb[0].mxu0
          %v1374 = vadd.f32 %v1230, %v1373
          %v1375 = vpop.f32.mrb[0].mxu0
          %1376 = vdwg.mxu0
          %1377 = vst [vmem:[#allocation11] sm:$0xff] %v1315
          %1378 = vst [vmem:[#allocation11 + $0x8] sm:$0xff] %v1318
          %1379 = vst [vmem:[#allocation11 + $0x10] sm:$0xff] %v1323
          %1380 = vst [vmem:[#allocation11 + $0x18] sm:$0xff] %v1326
          %1381 = vst [vmem:[#allocation11 + $0x20] sm:$0xff] %v1331
          %1382 = vst [vmem:[#allocation11 + $0x28] sm:$0xff] %v1334
          %1383 = vst [vmem:[#allocation11 + $0x30] sm:$0xff] %v1339
          %1384 = vst [vmem:[#allocation11 + $0x38] sm:$0xff] %v1342
          %1385 = vst [vmem:[#allocation11 + $0x40] sm:$0xff] %v1347
          %1386 = vst [vmem:[#allocation11 + $0x48] sm:$0xff] %v1350
          %1387 = vst [vmem:[#allocation11 + $0x50] sm:$0xff] %v1355
          %1388 = vst [vmem:[#allocation11 + $0x58] sm:$0xff] %v1358
          %1389 = vst [vmem:[#allocation11 + $0x60] sm:$0xff] %v1363
          %1390 = vst [vmem:[#allocation11 + $0x68] sm:$0xff] %v1366
          %1391 = vst [vmem:[#allocation11 + $0x70] sm:$0xff] %v1371
          %1392 = vst [vmem:[#allocation11 + $0x78] sm:$0xff] %v1374
        $region76: #{tpu_custom_call.1} parent=47 // pred_fallthru
          _
        // Predicated region
        $region77: #{tpu_custom_call.1} parent=47 // pred_check
          %p1393 = pneg %p196
        $region78: #{tpu_custom_call.1} parent=47 // pred_check_branch
          %1395 = sbr.rel (%p1393) target = $region80
        $region79: #{tpu_custom_call.1} parent=47 // pred_region
          %s1397 = ssub.s32 2048, 2048
          %1398 = vsyncadd [#allocation5], %s1397
          %s1399 = sshll.u32 [#allocation11], 4
          %s1400 = int_to_ptr.vmem [resolvable:$true] %s1399
          %1405 = dma.vmem_to_hbm [thread:$0]  %s1400, 2048, %s7, [#allocation5], 128, 128, 8
        $region80: #{tpu_custom_call.1} parent=47 // pred_fallthru
          _
        // Predicated region
        $region81: #{tpu_custom_call.1} parent=47 // pred_check
          %p1406 = pneg %p196
        $region82: #{tpu_custom_call.1} parent=47 // pred_check_branch
          %1408 = sbr.rel (%p1406) target = $region84
        $region83: #{tpu_custom_call.1} parent=47 // pred_region
          %1409 = dma.done [#allocation5], 2048
        $region84: #{tpu_custom_call.1} parent=47 // pred_fallthru
          _
      $region48: #{tpu_custom_call.1} parent=5 // pred_fallthru
        _
      %p1410 = scmp.le.s32.totalorder 2, %s16
      // Predicated region
      $region85: #{tpu_custom_call.1} parent=5 // pred_check
        %p1411 = pneg %p1410
      $region86: #{tpu_custom_call.1} parent=5 // pred_check_branch
        %1413 = sbr.rel (%p1411) target = $region88
      $region87: #{tpu_custom_call.1} parent=5 // pred_region
        %s1414 = ssub.s32 %s16, 2
      $region88: #{tpu_custom_call.1} parent=5 // pred_fallthru
        _
    $region6: #{tpu_custom_call.1} parent=1 // loop_footer
      %s20 = sadd.s32 1, %s16
    $region7: #{tpu_custom_call.1} parent=1 // loop_footer_branch
      %15 = sbr.rel target = $region3
    $region8: #{tpu_custom_call.1} parent=1 // loop_exit
      _
    %1415 = vsyncpa [#allocation4], 1
    %s1416 = scalar_lea.sflag [#allocation4], 1
    %1417 = vsyncpa %s1416, 1
    %1418 = vsyncpa [#allocation7], 1
    %1419 = vsyncpa [#allocation5], 1
    %s1420 = scalar_lea.sflag [#allocation5], 1
    %1421 = vsyncpa %s1420, 1

</llo_original>
